<compile_context>
chip_gen: v5e
topology: v5e:2x2
jax: 0.10.0
libtpu: 0.0.40
codegen_flags: <defaults>
</compile_context>

<pallas_src>
import functools

import jax
import jax.numpy as jnp
from jax.experimental import pallas as pl
from jax.experimental.pallas import tpu as pltpu

IN_DIM = 28 * 28      # 784
HID = 128
LAST = 32             # last_layer_size (encoder bottleneck)
NUM_CLASSES = 10


def _round_up(a, m):
    return (a + m - 1) // m * m


def _sigmoid(z):
    # logistic via tanh -> EUP slot (otherwise-free after the layer-1 tanh)
    return 0.5 * (1.0 + jnp.tanh(0.5 * z))


def aec_kernel(x_ref, w1_ref, b1_ref, w2_ref, b2_ref, wo_ref, bo_ref, out_ref):
    """Full classifier forward (3 matmuls + activations) for one batch tile."""
    # x streamed once from HBM in the caller's dtype; cast in-register so all
    # matmuls run as bf16 MXU ops with f32 accumulation.
    x = x_ref[...].astype(jnp.bfloat16)

    # encoder layer 1: 784 -> 128, tanh
    h1 = jnp.tanh(
        jnp.dot(x, w1_ref[...], preferred_element_type=jnp.float32) + b1_ref[...])

    # encoder layer 2: 128 -> 32, sigmoid
    enc = _sigmoid(
        jnp.dot(h1.astype(jnp.bfloat16), w2_ref[...],
                preferred_element_type=jnp.float32) + b2_ref[...])

    # classifier head: 32 -> 10, sigmoid
    logits = jnp.dot(enc.astype(jnp.bfloat16), wo_ref[...],
                     preferred_element_type=jnp.float32) + bo_ref[...]
    out_ref[...] = _sigmoid(logits).astype(out_ref.dtype)


@functools.partial(jax.jit, static_argnames=("tile_b",))
def aec_forward(x, params, tile_b=512):
    B, D = x.shape
    assert D == IN_DIM
    w1, b1, w2, b2, wo, bo = params

    # Weights are tiny (~0.2 MB total, no decoder) and stay resident in VMEM;
    # cast once to bf16. Biases stay f32 (added to f32 accumulators).
    w1b = w1.astype(jnp.bfloat16)
    w2b = w2.astype(jnp.bfloat16)
    wob = wo.astype(jnp.bfloat16)
    b1f = b1.astype(jnp.float32)
    b2f = b2.astype(jnp.float32)
    bof = bo.astype(jnp.float32)

    # Batch tiling: no padding / copying of x. Guarantee >= 2 grid steps when
    # possible (v7x megacore), round tile to 16 sublanes, ragged final tile is
    # handled by Pallas boundary masking.
    tile = min(tile_b, _round_up(pl.cdiv(B, 2), 16))
    tile = max(16, _round_up(tile, 16))
    grid = (pl.cdiv(B, tile),)

    batch_map = lambda i: (i, 0)
    full_map = lambda i: (0, 0)

    in_specs = [
        pl.BlockSpec((tile, IN_DIM), batch_map),       # x  (streamed once)
        pl.BlockSpec((IN_DIM, HID), full_map),         # w1
        pl.BlockSpec((1, HID), full_map),              # b1
        pl.BlockSpec((HID, LAST), full_map),           # w2
        pl.BlockSpec((1, LAST), full_map),             # b2
        pl.BlockSpec((LAST, NUM_CLASSES), full_map),   # wo
        pl.BlockSpec((1, NUM_CLASSES), full_map),      # bo
    ]
    out_spec = pl.BlockSpec((tile, NUM_CLASSES), batch_map)

    # VMEM budget: double-buffered x/out tiles + resident bf16 weights + f32
    # intermediates, with headroom. Capped at 48 MiB so it always fits under
    # v7x's 64 MiB physical VMEM (v5e/v6e have 128 MiB).
    x_itemsize = jnp.dtype(x.dtype).itemsize
    weight_bytes = ((IN_DIM * HID + HID * LAST + LAST * NUM_CLASSES) * 2
                    + (HID + LAST + NUM_CLASSES) * 4)
    tile_bytes = tile * IN_DIM * x_itemsize + tile * NUM_CLASSES * 2
    interm_bytes = tile * (IN_DIM + HID + LAST + NUM_CLASSES) * 4
    est = 2 * (tile_bytes + weight_bytes) + 2 * interm_bytes + (4 << 20)
    vmem_limit = int(min(48 << 20, max(32 << 20, est)))

    flops = 2 * B * (IN_DIM * HID + HID * LAST + LAST * NUM_CLASSES)
    transcendentals = B * (HID + LAST + NUM_CLASSES)
    bytes_accessed = (B * IN_DIM * x_itemsize       # x streamed exactly once
                      + B * NUM_CLASSES * 2         # bf16 output
                      + weight_bytes)               # resident weights
    cost = pl.CostEstimate(flops=flops,
                           transcendentals=transcendentals,
                           bytes_accessed=bytes_accessed)

    out = pl.pallas_call(
        aec_kernel,
        out_shape=jax.ShapeDtypeStruct((B, NUM_CLASSES), jnp.bfloat16),
        grid=grid,
        in_specs=in_specs,
        out_specs=out_spec,
        compiler_params=pltpu.CompilerParams(
            dimension_semantics=("parallel",),
            vmem_limit_bytes=vmem_limit),
        cost_estimate=cost,
    )(x, w1b, b1f, w2b, b2f, wob, bof)

    return out


def init_params(key):
    """PyTorch-Linear-style init: U(-1/sqrt(fan_in), +1/sqrt(fan_in)), f32."""
    dims = [(IN_DIM, HID), (HID, LAST), (LAST, NUM_CLASSES)]
    params = []
    for (fan_in, fan_out) in dims:
        key, kw, kb = jax.random.split(key, 3)
        bound = 1.0 / jnp.sqrt(fan_in)
        w = jax.random.uniform(kw, (fan_in, fan_out), jnp.float32, -bound, bound)
        b = jax.random.uniform(kb, (1, fan_out), jnp.float32, -bound, bound)
        params += [w, b]
    return tuple(params)


def aec_reference(x, params):
    w1, b1, w2, b2, wo, bo = params
    h1 = jnp.tanh(x @ w1 + b1)
    enc = jax.nn.sigmoid(h1 @ w2 + b2)
    return jax.nn.sigmoid(enc @ wo + bo)


if __name__ == "__main__":
    key = jax.random.PRNGKey(0)
    kp, kx = jax.random.split(key)

    params = init_params(kp)

    # Deliberately NOT a multiple of the tile: exercises the ceil-div grid,
    # the ">= 2 grid steps" heuristic (tile=112, grid=(2,)) and the ragged
    # final boundary block (88 valid rows).
    B = 200
    x = jax.random.uniform(kx, (B, IN_DIM), jnp.float32)  # flattened MNIST-like

    out = aec_forward(x, params)
    out = jax.block_until_ready(out)

    ref = aec_reference(x, params)
    assert out.shape == (B, NUM_CLASSES)
    max_err = float(jnp.max(jnp.abs(out.astype(jnp.float32) - ref)))
    # bf16 weights/activations/output -> loosened tolerance vs. f32 reference.
    assert max_err < 3e-2, f"mismatch vs reference: max abs err {max_err}"

    print("KERNEL_OK")
</pallas_src>

<mosaic_0001>
module attributes {stable_mosaic.version = 11 : i64} {
  func.func @aec_kernel(%arg0: i32, %arg1: memref<112x784xf32, #tpu.memory_space<vmem>>, %arg2: memref<784x128xbf16, #tpu.memory_space<vmem>>, %arg3: memref<1x128xf32, #tpu.memory_space<vmem>>, %arg4: memref<128x32xbf16, #tpu.memory_space<vmem>>, %arg5: memref<1x32xf32, #tpu.memory_space<vmem>>, %arg6: memref<32x10xbf16, #tpu.memory_space<vmem>>, %arg7: memref<1x10xf32, #tpu.memory_space<vmem>>, %arg8: memref<112x10xbf16, #tpu.memory_space<vmem>>) attributes {dimension_semantics = [#tpu.dimension_semantics<parallel>], iteration_bounds = array<i64: 2>, scalar_prefetch = 0 : i64, scratch_operands = 0 : i64, tpu.core_type = #tpu.core_type<tc>, window_params = [{transform_indices = @transform_0, window_bounds = array<i64: 112, 784>}, {pipeline_mode = #tpu.pipeline_mode<synchronous>, transform_indices = @transform_1, window_bounds = array<i64: 784, 128>}, {pipeline_mode = #tpu.pipeline_mode<synchronous>, transform_indices = @transform_2, window_bounds = array<i64: 1, 128>}, {pipeline_mode = #tpu.pipeline_mode<synchronous>, transform_indices = @transform_3, window_bounds = array<i64: 128, 32>}, {pipeline_mode = #tpu.pipeline_mode<synchronous>, transform_indices = @transform_4, window_bounds = array<i64: 1, 32>}, {pipeline_mode = #tpu.pipeline_mode<synchronous>, transform_indices = @transform_5, window_bounds = array<i64: 32, 10>}, {pipeline_mode = #tpu.pipeline_mode<synchronous>, transform_indices = @transform_6, window_bounds = array<i64: 1, 10>}, {transform_indices = @transform_7, window_bounds = array<i64: 112, 10>}]} {
    %c0 = arith.constant 0 : index
    %c0_0 = arith.constant 0 : index
    %0 = vector.load %arg1[%c0, %c0_0] : memref<112x784xf32, #tpu.memory_space<vmem>>, vector<112x784xf32>
    %1 = arith.truncf %0 : vector<112x784xf32> to vector<112x784xbf16>
    %c0_1 = arith.constant 0 : index
    %c0_2 = arith.constant 0 : index
    %2 = vector.load %arg2[%c0_1, %c0_2] : memref<784x128xbf16, #tpu.memory_space<vmem>>, vector<784x128xbf16>
    %cst = arith.constant dense<0.000000e+00> : vector<112x128xf32>
    %3 = tpu.matmul %1, %2, %cst {dimension_numbers = #tpu.dot_dimension_numbers<[1], [0], [0], [1], [0, 0, 1, 1], [], []>} : vector<112x784xbf16>, vector<784x128xbf16>, vector<112x128xf32> -> vector<112x128xf32>
    %c0_3 = arith.constant 0 : index
    %c0_4 = arith.constant 0 : index
    %4 = vector.load %arg3[%c0_3, %c0_4] : memref<1x128xf32, #tpu.memory_space<vmem>>, vector<1x128xf32>
    %5 = vector.broadcast %4 : vector<1x128xf32> to vector<112x128xf32>
    %6 = arith.addf %3, %5 : vector<112x128xf32>
    %7 = math.tanh %6 : vector<112x128xf32>
    %8 = arith.truncf %7 : vector<112x128xf32> to vector<112x128xbf16>
    %c0_5 = arith.constant 0 : index
    %c0_6 = arith.constant 0 : index
    %9 = vector.load %arg4[%c0_5, %c0_6] : memref<128x32xbf16, #tpu.memory_space<vmem>>, vector<128x32xbf16>
    %cst_7 = arith.constant dense<0.000000e+00> : vector<112x32xf32>
    %10 = tpu.matmul %8, %9, %cst_7 {dimension_numbers = #tpu.dot_dimension_numbers<[1], [0], [0], [1], [0, 0, 1, 1], [], []>} : vector<112x128xbf16>, vector<128x32xbf16>, vector<112x32xf32> -> vector<112x32xf32>
    %c0_8 = arith.constant 0 : index
    %c0_9 = arith.constant 0 : index
    %11 = vector.load %arg5[%c0_8, %c0_9] : memref<1x32xf32, #tpu.memory_space<vmem>>, vector<1x32xf32>
    %12 = vector.broadcast %11 : vector<1x32xf32> to vector<112x32xf32>
    %13 = arith.addf %10, %12 : vector<112x32xf32>
    %cst_10 = arith.constant 5.000000e-01 : f32
    %14 = vector.broadcast %cst_10 : f32 to vector<112x32xf32>
    %15 = arith.mulf %14, %13 : vector<112x32xf32>
    %16 = math.tanh %15 : vector<112x32xf32>
    %cst_11 = arith.constant 1.000000e+00 : f32
    %17 = vector.broadcast %cst_11 : f32 to vector<112x32xf32>
    %18 = arith.addf %17, %16 : vector<112x32xf32>
    %cst_12 = arith.constant 5.000000e-01 : f32
    %19 = vector.broadcast %cst_12 : f32 to vector<112x32xf32>
    %20 = arith.mulf %19, %18 : vector<112x32xf32>
    %21 = arith.truncf %20 : vector<112x32xf32> to vector<112x32xbf16>
    %c0_13 = arith.constant 0 : index
    %c0_14 = arith.constant 0 : index
    %22 = vector.load %arg6[%c0_13, %c0_14] : memref<32x10xbf16, #tpu.memory_space<vmem>>, vector<32x10xbf16>
    %cst_15 = arith.constant dense<0.000000e+00> : vector<112x10xf32>
    %23 = tpu.matmul %21, %22, %cst_15 {dimension_numbers = #tpu.dot_dimension_numbers<[1], [0], [0], [1], [0, 0, 1, 1], [], []>} : vector<112x32xbf16>, vector<32x10xbf16>, vector<112x10xf32> -> vector<112x10xf32>
    %c0_16 = arith.constant 0 : index
    %c0_17 = arith.constant 0 : index
    %24 = vector.load %arg7[%c0_16, %c0_17] : memref<1x10xf32, #tpu.memory_space<vmem>>, vector<1x10xf32>
    %25 = vector.broadcast %24 : vector<1x10xf32> to vector<112x10xf32>
    %26 = arith.addf %23, %25 : vector<112x10xf32>
    %cst_18 = arith.constant 5.000000e-01 : f32
    %27 = vector.broadcast %cst_18 : f32 to vector<112x10xf32>
    %28 = arith.mulf %27, %26 : vector<112x10xf32>
    %29 = math.tanh %28 : vector<112x10xf32>
    %cst_19 = arith.constant 1.000000e+00 : f32
    %30 = vector.broadcast %cst_19 : f32 to vector<112x10xf32>
    %31 = arith.addf %30, %29 : vector<112x10xf32>
    %cst_20 = arith.constant 5.000000e-01 : f32
    %32 = vector.broadcast %cst_20 : f32 to vector<112x10xf32>
    %33 = arith.mulf %32, %31 : vector<112x10xf32>
    %34 = arith.truncf %33 : vector<112x10xf32> to vector<112x10xbf16>
    %c0_21 = arith.constant 0 : index
    %c0_22 = arith.constant 0 : index
    %35 = vector.load %arg8[%c0_21, %c0_22] : memref<112x10xbf16, #tpu.memory_space<vmem>>, vector<112x10xbf16>
    tpu.vector_store %arg8[%c0_21, %c0_22], %34 {strides = array<i32>} : memref<112x10xbf16, #tpu.memory_space<vmem>>, vector<112x10xbf16>,
    return
  }
  func.func @transform_0(%arg0: i32) -> (i32, i32) {
    %c0_i32 = arith.constant 0 : i32
    %c0_i32_0 = arith.constant 0 : i32
    return %arg0, %c0_i32 : i32, i32
  }
  func.func @transform_1(%arg0: i32) -> (i32, i32) {
    %c0_i32 = arith.constant 0 : i32
    %c0_i32_0 = arith.constant 0 : i32
    %c0_i32_1 = arith.constant 0 : i32
    return %c0_i32, %c0_i32_0 : i32, i32
  }
  func.func @transform_2(%arg0: i32) -> (i32, i32) {
    %c0_i32 = arith.constant 0 : i32
    %c0_i32_0 = arith.constant 0 : i32
    %c0_i32_1 = arith.constant 0 : i32
    return %c0_i32, %c0_i32_0 : i32, i32
  }
  func.func @transform_3(%arg0: i32) -> (i32, i32) {
    %c0_i32 = arith.constant 0 : i32
    %c0_i32_0 = arith.constant 0 : i32
    %c0_i32_1 = arith.constant 0 : i32
    return %c0_i32, %c0_i32_0 : i32, i32
  }
  func.func @transform_4(%arg0: i32) -> (i32, i32) {
    %c0_i32 = arith.constant 0 : i32
    %c0_i32_0 = arith.constant 0 : i32
    %c0_i32_1 = arith.constant 0 : i32
    return %c0_i32, %c0_i32_0 : i32, i32
  }
  func.func @transform_5(%arg0: i32) -> (i32, i32) {
    %c0_i32 = arith.constant 0 : i32
    %c0_i32_0 = arith.constant 0 : i32
    %c0_i32_1 = arith.constant 0 : i32
    return %c0_i32, %c0_i32_0 : i32, i32
  }
  func.func @transform_6(%arg0: i32) -> (i32, i32) {
    %c0_i32 = arith.constant 0 : i32
    %c0_i32_0 = arith.constant 0 : i32
    %c0_i32_1 = arith.constant 0 : i32
    return %c0_i32, %c0_i32_0 : i32, i32
  }
  func.func @transform_7(%arg0: i32) -> (i32, i32) {
    %c0_i32 = arith.constant 0 : i32
    %c0_i32_0 = arith.constant 0 : i32
    return %arg0, %c0_i32 : i32, i32
  }
}

</mosaic_0001>

<llo_original>
// kernel: aec_forward.1
$region0: #{aec_forward.1}
  #allocation0 [shape = 'u32[]', space=smem, size = 0x4, offset = 0x4, fixed_abs, tag = 'smem constant byte address 0x4 - core index']
  #allocation1 [shape = 'u32[72,128]{1,0:T(1,128)}', space=vmem, size = 0x9000, scoped, tag = 'internal scratch']
  %s0 = inlined_call_operand.hbm [shape: f32[200,784], index: 0, kind: input, shape index: {}]
  %s1 = inlined_call_operand.vmem [shape: bf16[784,128], index: 1, kind: input, shape index: {}]
  %s2 = inlined_call_operand.vmem [shape: f32[1,128], index: 2, kind: input, shape index: {}]
  %s3 = inlined_call_operand.vmem [shape: bf16[128,32], index: 3, kind: input, shape index: {}]
  %s4 = inlined_call_operand.vmem [shape: f32[1,32], index: 4, kind: input, shape index: {}]
  %s5 = inlined_call_operand.vmem [shape: bf16[32,10], index: 5, kind: input, shape index: {}]
  %s6 = inlined_call_operand.vmem [shape: f32[1,10], index: 6, kind: input, shape index: {}]
  %s7 = inlined_call_operand.vmem [shape: bf16[200,10], index: 7, kind: output, shape index: {}]
  %s8 = sld [smem:[#allocation0]]
  $region109: #{aec_forward.1} parent=0
    _
  %s10 = ssub.s32 1, %s8
  %s11 = scalar_select 0, %s10, %s8
  $region1: #{aec_forward.1} parent=0
    #allocation2 [shape = 'u8[802816]{0}', space=vmem, size = 0xc4000, scoped, tag = 'input window, operand 0']
    #allocation3 [shape = 's32[2]{0}', space=sflag, size = 0x8, scoped, tag = 'scoped memory for aec_forward.1']
    #allocation4 [shape = 'u8[57344]{0}', space=vmem, size = 0xe000, scoped, tag = 'output window, operand 0']
    %12 = vsyncpa [#allocation3], 0
    %s13 = scalar_lea.sflag [#allocation3], 1
    %14 = vsyncpa %s13, 0
    loop: start=0, step=1, limit=4
    $region2: #{aec_forward.1} parent=1 // loop_pre_header
      _
    $region3: #{aec_forward.1} parent=1 // loop_header
      %s16 = sphi 0, %s20
      %p17 = scmp.ge.s32.totalorder %s16, 4
      %s26 = sphi 0, %s28
      %s29 = sphi 0, %s26
      %s30 = sphi 0, %s29
      %s46 = sphi 0, %s30
      %s50 = sphi 0, %s50
      %s52 = sphi 0, %s50
      %s53 = sphi 0, %s52
      %s67 = sphi 0, %s53
      %s71 = sphi 0, %s71
      %s73 = sphi 0, %s71
      %s74 = sphi 0, %s73
      %s88 = sphi 0, %s74
      %s92 = sphi 0, %s92
      %s94 = sphi 0, %s92
      %s95 = sphi 0, %s94
      %s109 = sphi 0, %s95
      %s113 = sphi 0, %s113
      %s115 = sphi 0, %s113
      %s116 = sphi 0, %s115
      %s130 = sphi 0, %s116
      %s134 = sphi 0, %s134
      %s136 = sphi 0, %s134
      %s137 = sphi 0, %s136
      %s151 = sphi 0, %s137
      %s155 = sphi 0, %s155
      %s157 = sphi 0, %s155
      %s158 = sphi 0, %s157
      %s172 = sphi 0, %s158
      %s178 = sphi 0, %s180
      %s181 = sphi 0, %s178
      %s182 = sphi 0, %s181
      %s198 = sphi 0, %s182
    $region4: #{aec_forward.1} parent=1 // loop_header_branch
      %19 = sbr.rel (%p17) target = $region8
    $region5: #{aec_forward.1} parent=1 // loop_body
      %s21 = ssub.s32 %s16, 1
      %s22 = ssub.s32 %s16, 2
      %s23 = sadd.s32 %s16, 1
      %s24 = ssub.s32 %s16, %s23
      %p25 = scmp.eq.s32.totalorder %s24, 0
      %s27 = sadd.s32 %s26, 1
      %s28 = scalar_select %p25, %s26, %s27
      %p31 = pneg %p25
      %p32 = scmp.eq.s32.totalorder %s16, 1
      %p33 = por %p31, %p32
      %p34 = scmp.ne.s32.totalorder %s26, %s29
      %p35 = scmp.eq.s32.totalorder %s16, 0
      %p36 = por %p34, %p35
      %p37 = scmp.ne.s32.totalorder %s26, %s29
      %p38 = scmp.eq.s32.totalorder %s21, 1
      %p39 = por %p37, %p38
      %p40 = scmp.ne.s32.totalorder %s29, %s30
      %p41 = scmp.eq.s32.totalorder %s21, 0
      %p42 = por %p40, %p41
      %p43 = scmp.ne.s32.totalorder %s29, %s30
      %p44 = scmp.eq.s32.totalorder %s22, 1
      %p45 = por %p43, %p44
      %p47 = scmp.ne.s32.totalorder %s30, %s46
      %p48 = scmp.eq.s32.totalorder %s22, 0
      %p49 = por %p47, %p48
      %s51 = sadd.s32 %s50, 1
      %p54 = scmp.eq.s32.totalorder %s16, 1
      %p55 = scmp.ne.s32.totalorder %s50, %s52
      %p56 = scmp.eq.s32.totalorder %s16, 0
      %p57 = por %p55, %p56
      %p58 = scmp.ne.s32.totalorder %s50, %s52
      %p59 = scmp.eq.s32.totalorder %s21, 1
      %p60 = por %p58, %p59
      %p61 = scmp.ne.s32.totalorder %s52, %s53
      %p62 = scmp.eq.s32.totalorder %s21, 0
      %p63 = por %p61, %p62
      %p64 = scmp.ne.s32.totalorder %s52, %s53
      %p65 = scmp.eq.s32.totalorder %s22, 1
      %p66 = por %p64, %p65
      %p68 = scmp.ne.s32.totalorder %s53, %s67
      %p69 = scmp.eq.s32.totalorder %s22, 0
      %p70 = por %p68, %p69
      %s72 = sadd.s32 %s71, 1
      %p75 = scmp.eq.s32.totalorder %s16, 1
      %p76 = scmp.ne.s32.totalorder %s71, %s73
      %p77 = scmp.eq.s32.totalorder %s16, 0
      %p78 = por %p76, %p77
      %p79 = scmp.ne.s32.totalorder %s71, %s73
      %p80 = scmp.eq.s32.totalorder %s21, 1
      %p81 = por %p79, %p80
      %p82 = scmp.ne.s32.totalorder %s73, %s74
      %p83 = scmp.eq.s32.totalorder %s21, 0
      %p84 = por %p82, %p83
      %p85 = scmp.ne.s32.totalorder %s73, %s74
      %p86 = scmp.eq.s32.totalorder %s22, 1
      %p87 = por %p85, %p86
      %p89 = scmp.ne.s32.totalorder %s74, %s88
      %p90 = scmp.eq.s32.totalorder %s22, 0
      %p91 = por %p89, %p90
      %s93 = sadd.s32 %s92, 1
      %p96 = scmp.eq.s32.totalorder %s16, 1
      %p97 = scmp.ne.s32.totalorder %s92, %s94
      %p98 = scmp.eq.s32.totalorder %s16, 0
      %p99 = por %p97, %p98
      %p100 = scmp.ne.s32.totalorder %s92, %s94
      %p101 = scmp.eq.s32.totalorder %s21, 1
      %p102 = por %p100, %p101
      %p103 = scmp.ne.s32.totalorder %s94, %s95
      %p104 = scmp.eq.s32.totalorder %s21, 0
      %p105 = por %p103, %p104
      %p106 = scmp.ne.s32.totalorder %s94, %s95
      %p107 = scmp.eq.s32.totalorder %s22, 1
      %p108 = por %p106, %p107
      %p110 = scmp.ne.s32.totalorder %s95, %s109
      %p111 = scmp.eq.s32.totalorder %s22, 0
      %p112 = por %p110, %p111
      %s114 = sadd.s32 %s113, 1
      %p117 = scmp.eq.s32.totalorder %s16, 1
      %p118 = scmp.ne.s32.totalorder %s113, %s115
      %p119 = scmp.eq.s32.totalorder %s16, 0
      %p120 = por %p118, %p119
      %p121 = scmp.ne.s32.totalorder %s113, %s115
      %p122 = scmp.eq.s32.totalorder %s21, 1
      %p123 = por %p121, %p122
      %p124 = scmp.ne.s32.totalorder %s115, %s116
      %p125 = scmp.eq.s32.totalorder %s21, 0
      %p126 = por %p124, %p125
      %p127 = scmp.ne.s32.totalorder %s115, %s116
      %p128 = scmp.eq.s32.totalorder %s22, 1
      %p129 = por %p127, %p128
      %p131 = scmp.ne.s32.totalorder %s116, %s130
      %p132 = scmp.eq.s32.totalorder %s22, 0
      %p133 = por %p131, %p132
      %s135 = sadd.s32 %s134, 1
      %p138 = scmp.eq.s32.totalorder %s16, 1
      %p139 = scmp.ne.s32.totalorder %s134, %s136
      %p140 = scmp.eq.s32.totalorder %s16, 0
      %p141 = por %p139, %p140
      %p142 = scmp.ne.s32.totalorder %s134, %s136
      %p143 = scmp.eq.s32.totalorder %s21, 1
      %p144 = por %p142, %p143
      %p145 = scmp.ne.s32.totalorder %s136, %s137
      %p146 = scmp.eq.s32.totalorder %s21, 0
      %p147 = por %p145, %p146
      %p148 = scmp.ne.s32.totalorder %s136, %s137
      %p149 = scmp.eq.s32.totalorder %s22, 1
      %p150 = por %p148, %p149
      %p152 = scmp.ne.s32.totalorder %s137, %s151
      %p153 = scmp.eq.s32.totalorder %s22, 0
      %p154 = por %p152, %p153
      %s156 = sadd.s32 %s155, 1
      %p159 = scmp.eq.s32.totalorder %s16, 1
      %p160 = scmp.ne.s32.totalorder %s155, %s157
      %p161 = scmp.eq.s32.totalorder %s16, 0
      %p162 = por %p160, %p161
      %p163 = scmp.ne.s32.totalorder %s155, %s157
      %p164 = scmp.eq.s32.totalorder %s21, 1
      %p165 = por %p163, %p164
      %p166 = scmp.ne.s32.totalorder %s157, %s158
      %p167 = scmp.eq.s32.totalorder %s21, 0
      %p168 = por %p166, %p167
      %p169 = scmp.ne.s32.totalorder %s157, %s158
      %p170 = scmp.eq.s32.totalorder %s22, 1
      %p171 = por %p169, %p170
      %p173 = scmp.ne.s32.totalorder %s158, %s172
      %p174 = scmp.eq.s32.totalorder %s22, 0
      %p175 = por %p173, %p174
      %s176 = ssub.s32 %s16, %s23
      %p177 = scmp.eq.s32.totalorder %s176, 0
      %s179 = sadd.s32 %s178, 1
      %s180 = scalar_select %p177, %s178, %s179
      %p183 = pneg %p177
      %p184 = scmp.eq.s32.totalorder %s16, 1
      %p185 = por %p183, %p184
      %p186 = scmp.ne.s32.totalorder %s178, %s181
      %p187 = scmp.eq.s32.totalorder %s16, 0
      %p188 = por %p186, %p187
      %p189 = scmp.ne.s32.totalorder %s178, %s181
      %p190 = scmp.eq.s32.totalorder %s21, 1
      %p191 = por %p189, %p190
      %p192 = scmp.ne.s32.totalorder %s181, %s182
      %p193 = scmp.eq.s32.totalorder %s21, 0
      %p194 = por %p192, %p193
      %p195 = scmp.ne.s32.totalorder %s181, %s182
      %p196 = scmp.eq.s32.totalorder %s22, 1
      %p197 = por %p195, %p196
      %p199 = scmp.ne.s32.totalorder %s182, %s198
      %p200 = scmp.eq.s32.totalorder %s22, 0
      %p201 = por %p199, %p200
      %p202 = scmp.le.s32.totalorder 1, %s16
      %p203 = scmp.lt.s32.totalorder %s16, 3
      %p204 = pnand %p202, %p203
      %p205 = pneg %p204
      // Predicated region
      $region9: #{aec_forward.1} parent=5 // pred_check
        _
      $region10: #{aec_forward.1} parent=5 // pred_check_branch
        %207 = sbr.rel (%p204) target = $region12
      $region11: #{aec_forward.1} parent=5 // pred_region
        %s208 = ssub.s32 %s16, 1
        // Predicated region
        $region13: #{aec_forward.1} parent=11 // pred_check
          %p209 = pneg %p63
        $region14: #{aec_forward.1} parent=11 // pred_check_branch
          %211 = sbr.rel (%p209) target = $region16
        $region15: #{aec_forward.1} parent=11 // pred_region
          _
        $region16: #{aec_forward.1} parent=11 // pred_fallthru
          _
        // Predicated region
        $region17: #{aec_forward.1} parent=11 // pred_check
          %p212 = pneg %p84
        $region18: #{aec_forward.1} parent=11 // pred_check_branch
          %214 = sbr.rel (%p212) target = $region20
        $region19: #{aec_forward.1} parent=11 // pred_region
          _
        $region20: #{aec_forward.1} parent=11 // pred_fallthru
          _
        // Predicated region
        $region21: #{aec_forward.1} parent=11 // pred_check
          %p215 = pneg %p105
        $region22: #{aec_forward.1} parent=11 // pred_check_branch
          %217 = sbr.rel (%p215) target = $region24
        $region23: #{aec_forward.1} parent=11 // pred_region
          _
        $region24: #{aec_forward.1} parent=11 // pred_fallthru
          _
        // Predicated region
        $region25: #{aec_forward.1} parent=11 // pred_check
          %p218 = pneg %p126
        $region26: #{aec_forward.1} parent=11 // pred_check_branch
          %220 = sbr.rel (%p218) target = $region28
        $region27: #{aec_forward.1} parent=11 // pred_region
          _
        $region28: #{aec_forward.1} parent=11 // pred_fallthru
          _
        // Predicated region
        $region29: #{aec_forward.1} parent=11 // pred_check
          %p221 = pneg %p147
        $region30: #{aec_forward.1} parent=11 // pred_check_branch
          %223 = sbr.rel (%p221) target = $region32
        $region31: #{aec_forward.1} parent=11 // pred_region
          _
        $region32: #{aec_forward.1} parent=11 // pred_fallthru
          _
        // Predicated region
        $region33: #{aec_forward.1} parent=11 // pred_check
          %p224 = pneg %p168
        $region34: #{aec_forward.1} parent=11 // pred_check_branch
          %226 = sbr.rel (%p224) target = $region36
        $region35: #{aec_forward.1} parent=11 // pred_region
          _
        $region36: #{aec_forward.1} parent=11 // pred_fallthru
          _
      $region12: #{aec_forward.1} parent=5 // pred_fallthru
        _
      %p227 = scmp.lt.s32.totalorder %s16, 2
      // Predicated region
      $region37: #{aec_forward.1} parent=5 // pred_check
        %p228 = pneg %p227
      $region38: #{aec_forward.1} parent=5 // pred_check_branch
        %230 = sbr.rel (%p228) target = $region40
      $region39: #{aec_forward.1} parent=5 // pred_region
        // Predicated region
        $region41: #{aec_forward.1} parent=39 // pred_check
          %p231 = pneg %p36
        $region42: #{aec_forward.1} parent=39 // pred_check_branch
          %233 = sbr.rel (%p231) target = $region44
        $region43: #{aec_forward.1} parent=39 // pred_region
          %s234 = sand.u32 %s26, 1
          %s235 = scalar_lea.sflag [#allocation3], %s234
          %s236 = sand.u32 %s26, 1
          %s237 = smul.addr %s236, 784
          %s238 = scalar_lea.vmem [#allocation2], %s237
          %s239 = smul.u32 14, %s16
          %s240 = ssub.s32 25, %s239
          %p241 = scmp.lt.s32.totalorder %s240, 14
          %s242 = scalar_select %p241, %s240, 14
          %s243 = smul.u32 8, %s242
          %s244 = smul.u32 %s243, 7
          %s245 = ssub.s32 784, %s244
          %s246 = sshll.u32 %s245, 4
          %247 = vsyncadd %s235, %s246
          %p248 = scmp.ne.s32.totalorder 0, %s244
          %s249 = smul.addr %s239, 7
          %s250 = smul.addr %s249, 8
          %s251 = scalar_lea.hbm %s0, %s250
          %s252 = smul.u32 56, %s242
          %s253 = sshll.u32 %s251, 4
          %s254 = int_to_ptr.hbm [resolvable:$true] %s253
          %s255 = sshll.u32 %s238, 4
          %s256 = int_to_ptr.vmem [resolvable:$true] %s255
          %s257 = sshll.u32 %s252, 4
          %261 = dma.hbm_to_vmem [thread:$0]  (%p248), %s254, %s257, %s256, %s235, 896, 896, 56
        $region44: #{aec_forward.1} parent=39 // pred_fallthru
          _
      $region40: #{aec_forward.1} parent=5 // pred_fallthru
        _
      %p262 = scmp.le.s32.totalorder 1, %s16
      %p263 = scmp.lt.s32.totalorder %s16, 3
      %p264 = pnand %p262, %p263
      %p265 = pneg %p264
      // Predicated region
      $region45: #{aec_forward.1} parent=5 // pred_check
        _
      $region46: #{aec_forward.1} parent=5 // pred_check_branch
        %267 = sbr.rel (%p264) target = $region48
      $region47: #{aec_forward.1} parent=5 // pred_region
        %s268 = ssub.s32 %s16, 1
        %s269 = sand.u32 %s29, 1
        %s270 = scalar_lea.sflag [#allocation3], %s269
        %s271 = sand.u32 %s29, 1
        %s272 = smul.addr %s271, 784
        %s273 = scalar_lea.vmem [#allocation2], %s272
        // Predicated region
        $region49: #{aec_forward.1} parent=47 // pred_check
          %p274 = pneg %p42
        $region50: #{aec_forward.1} parent=47 // pred_check_branch
          %276 = sbr.rel (%p274) target = $region52
        $region51: #{aec_forward.1} parent=47 // pred_region
          %278 = dma.done %s270, 12544
        $region52: #{aec_forward.1} parent=47 // pred_fallthru
          _
        %s279 = sand.u32 %s29, 1
        %s280 = scalar_lea.sflag [#allocation3], %s279
        %s281 = sand.u32 %s29, 1
        %s282 = smul.addr %s281, 784
        %s283 = scalar_lea.vmem [#allocation2], %s282
        %p284 = pneg %p42
        %p285 = pneg %p39
        %p286 = pneg %p63
        %p287 = pneg %p60
        %p288 = pneg %p84
        %p289 = pneg %p81
        %p290 = pneg %p105
        %p291 = pneg %p102
        %p292 = pneg %p126
        %p293 = pneg %p123
        %p294 = pneg %p147
        %p295 = pneg %p144
        %p296 = pneg %p168
        %p297 = pneg %p165
        %p298 = pneg %p194
        %p299 = pneg %p191
        %s300 = sand.u32 %s181, 1
        %s301 = sand.u32 %s181, 1
        %s302 = smul.addr %s301, 56
        %s303 = scalar_lea.vmem [#allocation4], %s302
        %s304 = smul.u32 14, %s21
        %s305 = ssub.s32 25, %s304
        %p306 = scmp.lt.s32.totalorder %s305, 14
        %s307 = scalar_select %p306, %s305, 14
        %s308 = smul.u32 8, %s307
        %s309 = smul.u32 %s308, 7
        %s310 = smul.u32 14, %s21
        %s311 = ssub.s32 25, %s310
        %p312 = scmp.lt.s32.totalorder %s311, 14
        %s313 = scalar_select %p312, %s311, 14
        %s314 = smul.u32 4, %s313
        %v316 = vld [vmem:[%s273] sm:$0xff]
        %v317 = vld [vmem:[%s273 + $0x8] sm:$0xff]
        %v318 = vld [vmem:[%s273 + $0x10] sm:$0xff]
        %v319 = vld [vmem:[%s273 + $0x18] sm:$0xff]
        %v320 = vld [vmem:[%s273 + $0x20] sm:$0xff]
        %v321 = vld [vmem:[%s273 + $0x28] sm:$0xff]
        %v322 = vld [vmem:[%s273 + $0x30] sm:$0xff]
        %v323 = vld [vmem:[%s273 + $0x38] sm:$0xff]
        %v324 = vld [vmem:[%s273 + $0x40] sm:$0xff]
        %v325 = vld [vmem:[%s273 + $0x48] sm:$0xff]
        %v326 = vld [vmem:[%s273 + $0x50] sm:$0xff]
        %v327 = vld [vmem:[%s273 + $0x58] sm:$0xff]
        %v328 = vld [vmem:[%s273 + $0x60] sm:$0xff]
        %v329 = vld [vmem:[%s273 + $0x68] sm:$0xff]
        %v330 = vld [vmem:[%s273 + $0x70] sm:$0xff]
        %v331 = vld [vmem:[%s273 + $0x78] sm:$0xff]
        %v332 = vld [vmem:[%s273 + $0x80] sm:$0xff]
        %v333 = vld [vmem:[%s273 + $0x88] sm:$0xff]
        %v334 = vld [vmem:[%s273 + $0x90] sm:$0xff]
        %v335 = vld [vmem:[%s273 + $0x98] sm:$0xff]
        %v336 = vld [vmem:[%s273 + $0xa0] sm:$0xff]
        %v337 = vld [vmem:[%s273 + $0xa8] sm:$0xff]
        %v338 = vld [vmem:[%s273 + $0xb0] sm:$0xff]
        %v339 = vld [vmem:[%s273 + $0xb8] sm:$0xff]
        %v340 = vld [vmem:[%s273 + $0xc0] sm:$0xff]
        %v341 = vld [vmem:[%s273 + $0xc8] sm:$0xff]
        %v342 = vld [vmem:[%s273 + $0xd0] sm:$0xff]
        %v343 = vld [vmem:[%s273 + $0xd8] sm:$0xff]
        %v344 = vld [vmem:[%s273 + $0xe0] sm:$0xff]
        %v345 = vld [vmem:[%s273 + $0xe8] sm:$0xff]
        %v346 = vld [vmem:[%s273 + $0xf0] sm:$0xff]
        %v347 = vld [vmem:[%s273 + $0xf8] sm:$0xff]
        %v348 = vld [vmem:[%s273 + $0x100] sm:$0xff]
        %v349 = vld [vmem:[%s273 + $0x108] sm:$0xff]
        %v350 = vld [vmem:[%s273 + $0x110] sm:$0xff]
        %v351 = vld [vmem:[%s273 + $0x118] sm:$0xff]
        %v352 = vld [vmem:[%s273 + $0x120] sm:$0xff]
        %v353 = vld [vmem:[%s273 + $0x128] sm:$0xff]
        %v354 = vld [vmem:[%s273 + $0x130] sm:$0xff]
        %v355 = vld [vmem:[%s273 + $0x138] sm:$0xff]
        %v356 = vld [vmem:[%s273 + $0x140] sm:$0xff]
        %v357 = vld [vmem:[%s273 + $0x148] sm:$0xff]
        %v358 = vld [vmem:[%s273 + $0x150] sm:$0xff]
        %v359 = vld [vmem:[%s273 + $0x158] sm:$0xff]
        %v360 = vld [vmem:[%s273 + $0x160] sm:$0xff]
        %v361 = vld [vmem:[%s273 + $0x168] sm:$0xff]
        %v362 = vld [vmem:[%s273 + $0x170] sm:$0xff]
        %v363 = vld [vmem:[%s273 + $0x178] sm:$0xff]
        %v364 = vld [vmem:[%s273 + $0x180] sm:$0xff]
        %v365 = vld [vmem:[%s273 + $0x188] sm:$0xff]
        %v366 = vld [vmem:[%s273 + $0x190] sm:$0xff]
        %v367 = vld [vmem:[%s273 + $0x198] sm:$0xff]
        %v368 = vld [vmem:[%s273 + $0x1a0] sm:$0xff]
        %v369 = vld [vmem:[%s273 + $0x1a8] sm:$0xff]
        %v370 = vld [vmem:[%s273 + $0x1b0] sm:$0xff]
        %v371 = vld [vmem:[%s273 + $0x1b8] sm:$0xff]
        %v372 = vld [vmem:[%s273 + $0x1c0] sm:$0xff]
        %v373 = vld [vmem:[%s273 + $0x1c8] sm:$0xff]
        %v374 = vld [vmem:[%s273 + $0x1d0] sm:$0xff]
        %v375 = vld [vmem:[%s273 + $0x1d8] sm:$0xff]
        %v376 = vld [vmem:[%s273 + $0x1e0] sm:$0xff]
        %v377 = vld [vmem:[%s273 + $0x1e8] sm:$0xff]
        %v378 = vld [vmem:[%s273 + $0x1f0] sm:$0xff]
        %v379 = vld [vmem:[%s273 + $0x1f8] sm:$0xff]
        %v380 = vld [vmem:[%s273 + $0x200] sm:$0xff]
        %v381 = vld [vmem:[%s273 + $0x208] sm:$0xff]
        %v382 = vld [vmem:[%s273 + $0x210] sm:$0xff]
        %v383 = vld [vmem:[%s273 + $0x218] sm:$0xff]
        %v384 = vld [vmem:[%s273 + $0x220] sm:$0xff]
        %v385 = vld [vmem:[%s273 + $0x228] sm:$0xff]
        %v386 = vld [vmem:[%s273 + $0x230] sm:$0xff]
        %v387 = vld [vmem:[%s273 + $0x238] sm:$0xff]
        %v388 = vld [vmem:[%s273 + $0x240] sm:$0xff]
        %v389 = vld [vmem:[%s273 + $0x248] sm:$0xff]
        %v390 = vld [vmem:[%s273 + $0x250] sm:$0xff]
        %v391 = vld [vmem:[%s273 + $0x258] sm:$0xff]
        %v392 = vld [vmem:[%s273 + $0x260] sm:$0xff]
        %v393 = vld [vmem:[%s273 + $0x268] sm:$0xff]
        %v394 = vld [vmem:[%s273 + $0x270] sm:$0xff]
        %v395 = vld [vmem:[%s273 + $0x278] sm:$0xff]
        %v396 = vld [vmem:[%s273 + $0x280] sm:$0xff]
        %v397 = vld [vmem:[%s273 + $0x288] sm:$0xff]
        %v398 = vld [vmem:[%s273 + $0x290] sm:$0xff]
        %v399 = vld [vmem:[%s273 + $0x298] sm:$0xff]
        %v400 = vld [vmem:[%s273 + $0x2a0] sm:$0xff]
        %v401 = vld [vmem:[%s273 + $0x2a8] sm:$0xff]
        %v402 = vld [vmem:[%s273 + $0x2b0] sm:$0xff]
        %v403 = vld [vmem:[%s273 + $0x2b8] sm:$0xff]
        %v404 = vld [vmem:[%s273 + $0x2c0] sm:$0xff]
        %v405 = vld [vmem:[%s273 + $0x2c8] sm:$0xff]
        %v406 = vld [vmem:[%s273 + $0x2d0] sm:$0xff]
        %v407 = vld [vmem:[%s273 + $0x2d8] sm:$0xff]
        %v408 = vld [vmem:[%s273 + $0x2e0] sm:$0xff]
        %v409 = vld [vmem:[%s273 + $0x2e8] sm:$0xff]
        %v410 = vld [vmem:[%s273 + $0x2f0] sm:$0xff]
        %v411 = vld [vmem:[%s273 + $0x2f8] sm:$0xff]
        %v412 = vld [vmem:[%s273 + $0x300] sm:$0xff]
        %v413 = vld [vmem:[%s273 + $0x308] sm:$0xff]
        %v414 = vpack.c.bf16 %v323, %v316
        %v415 = vpack.c.bf16 %v324, %v317
        %v416 = vpack.c.bf16 %v325, %v318
        %v417 = vpack.c.bf16 %v326, %v319
        %v418 = vpack.c.bf16 %v327, %v320
        %v419 = vpack.c.bf16 %v328, %v321
        %v420 = vpack.c.bf16 %v329, %v322
        %v421 = vpack.c.bf16 %v337, %v330
        %v422 = vpack.c.bf16 %v338, %v331
        %v423 = vpack.c.bf16 %v339, %v332
        %v424 = vpack.c.bf16 %v340, %v333
        %v425 = vpack.c.bf16 %v341, %v334
        %v426 = vpack.c.bf16 %v342, %v335
        %v427 = vpack.c.bf16 %v343, %v336
        %v428 = vpack.c.bf16 %v351, %v344
        %v429 = vpack.c.bf16 %v352, %v345
        %v430 = vpack.c.bf16 %v353, %v346
        %v431 = vpack.c.bf16 %v354, %v347
        %v432 = vpack.c.bf16 %v355, %v348
        %v433 = vpack.c.bf16 %v356, %v349
        %v434 = vpack.c.bf16 %v357, %v350
        %v435 = vpack.c.bf16 %v365, %v358
        %v436 = vpack.c.bf16 %v366, %v359
        %v437 = vpack.c.bf16 %v367, %v360
        %v438 = vpack.c.bf16 %v368, %v361
        %v439 = vpack.c.bf16 %v369, %v362
        %v440 = vpack.c.bf16 %v370, %v363
        %v441 = vpack.c.bf16 %v371, %v364
        %v442 = vpack.c.bf16 %v379, %v372
        %v443 = vpack.c.bf16 %v380, %v373
        %v444 = vpack.c.bf16 %v381, %v374
        %v445 = vpack.c.bf16 %v382, %v375
        %v446 = vpack.c.bf16 %v383, %v376
        %v447 = vpack.c.bf16 %v384, %v377
        %v448 = vpack.c.bf16 %v385, %v378
        %v449 = vpack.c.bf16 %v393, %v386
        %v450 = vpack.c.bf16 %v394, %v387
        %v451 = vpack.c.bf16 %v395, %v388
        %v452 = vpack.c.bf16 %v396, %v389
        %v453 = vpack.c.bf16 %v397, %v390
        %v454 = vpack.c.bf16 %v398, %v391
        %v455 = vpack.c.bf16 %v399, %v392
        %v456 = vpack.c.bf16 %v407, %v400
        %v457 = vpack.c.bf16 %v408, %v401
        %v458 = vpack.c.bf16 %v409, %v402
        %v459 = vpack.c.bf16 %v410, %v403
        %v460 = vpack.c.bf16 %v411, %v404
        %v461 = vpack.c.bf16 %v412, %v405
        %v462 = vpack.c.bf16 %v413, %v406
        %v463 = vld [vmem:[%s1] sm:$0xf]
        %v464 = vld [vmem:[%s1 + $0x4] sm:$0xf]
        %v465 = vld [vmem:[%s1 + $0x8] sm:$0xf]
        %v466 = vld [vmem:[%s1 + $0xc] sm:$0xf]
        %v467 = vld [vmem:[%s1 + $0x10] sm:$0xf]
        %v468 = vld [vmem:[%s1 + $0x14] sm:$0xf]
        %v469 = vld [vmem:[%s1 + $0x18] sm:$0xf]
        %v470 = vld [vmem:[%s1 + $0x1c] sm:$0xf]
        %v471 = vld [vmem:[%s1 + $0x20] sm:$0xf]
        %v472 = vld [vmem:[%s1 + $0x24] sm:$0xf]
        %v473 = vld [vmem:[%s1 + $0x28] sm:$0xf]
        %v474 = vld [vmem:[%s1 + $0x2c] sm:$0xf]
        %v475 = vld [vmem:[%s1 + $0x30] sm:$0xf]
        %v476 = vld [vmem:[%s1 + $0x34] sm:$0xf]
        %v477 = vld [vmem:[%s1 + $0x38] sm:$0xf]
        %v478 = vld [vmem:[%s1 + $0x3c] sm:$0xf]
        %v479 = vld [vmem:[%s1 + $0x40] sm:$0xf]
        %v480 = vld [vmem:[%s1 + $0x44] sm:$0xf]
        %v481 = vld [vmem:[%s1 + $0x48] sm:$0xf]
        %v482 = vld [vmem:[%s1 + $0x4c] sm:$0xf]
        %v483 = vld [vmem:[%s1 + $0x50] sm:$0xf]
        %v484 = vld [vmem:[%s1 + $0x54] sm:$0xf]
        %v485 = vld [vmem:[%s1 + $0x58] sm:$0xf]
        %v486 = vld [vmem:[%s1 + $0x5c] sm:$0xf]
        %v487 = vld [vmem:[%s1 + $0x60] sm:$0xf]
        %v488 = vld [vmem:[%s1 + $0x64] sm:$0xf]
        %v489 = vld [vmem:[%s1 + $0x68] sm:$0xf]
        %v490 = vld [vmem:[%s1 + $0x6c] sm:$0xf]
        %v491 = vld [vmem:[%s1 + $0x70] sm:$0xf]
        %v492 = vld [vmem:[%s1 + $0x74] sm:$0xf]
        %v493 = vld [vmem:[%s1 + $0x78] sm:$0xf]
        %v494 = vld [vmem:[%s1 + $0x7c] sm:$0xf]
        %v495 = vld [vmem:[%s1 + $0x80] sm:$0xf]
        %v496 = vld [vmem:[%s1 + $0x84] sm:$0xf]
        %v497 = vld [vmem:[%s1 + $0x88] sm:$0xf]
        %v498 = vld [vmem:[%s1 + $0x8c] sm:$0xf]
        %v499 = vld [vmem:[%s1 + $0x90] sm:$0xf]
        %v500 = vld [vmem:[%s1 + $0x94] sm:$0xf]
        %v501 = vld [vmem:[%s1 + $0x98] sm:$0xf]
        %v502 = vld [vmem:[%s1 + $0x9c] sm:$0xf]
        %v503 = vld [vmem:[%s1 + $0xa0] sm:$0xf]
        %v504 = vld [vmem:[%s1 + $0xa4] sm:$0xf]
        %v505 = vld [vmem:[%s1 + $0xa8] sm:$0xf]
        %v506 = vld [vmem:[%s1 + $0xac] sm:$0xf]
        %v507 = vld [vmem:[%s1 + $0xb0] sm:$0xf]
        %v508 = vld [vmem:[%s1 + $0xb4] sm:$0xf]
        %v509 = vld [vmem:[%s1 + $0xb8] sm:$0xf]
        %v510 = vld [vmem:[%s1 + $0xbc] sm:$0xf]
        %v511 = vld [vmem:[%s1 + $0xc0] sm:$0xf]
        %v512 = vld [vmem:[%s1 + $0xc4] sm:$0xf]
        %v513 = vld [vmem:[%s1 + $0xc8] sm:$0xf]
        %v514 = vld [vmem:[%s1 + $0xcc] sm:$0xf]
        %v515 = vld [vmem:[%s1 + $0xd0] sm:$0xf]
        %v516 = vld [vmem:[%s1 + $0xd4] sm:$0xf]
        %v517 = vld [vmem:[%s1 + $0xd8] sm:$0xf]
        %v518 = vld [vmem:[%s1 + $0xdc] sm:$0xf]
        %v519 = vld [vmem:[%s1 + $0xe0] sm:$0xf]
        %v520 = vld [vmem:[%s1 + $0xe4] sm:$0xf]
        %v521 = vld [vmem:[%s1 + $0xe8] sm:$0xf]
        %v522 = vld [vmem:[%s1 + $0xec] sm:$0xf]
        %v523 = vld [vmem:[%s1 + $0xf0] sm:$0xf]
        %v524 = vld [vmem:[%s1 + $0xf4] sm:$0xf]
        %v525 = vld [vmem:[%s1 + $0xf8] sm:$0xf]
        %v526 = vld [vmem:[%s1 + $0xfc] sm:$0xf]
        %v527 = vld [vmem:[%s1 + $0x100] sm:$0xf]
        %v528 = vld [vmem:[%s1 + $0x104] sm:$0xf]
        %v529 = vld [vmem:[%s1 + $0x108] sm:$0xf]
        %v530 = vld [vmem:[%s1 + $0x10c] sm:$0xf]
        %v531 = vld [vmem:[%s1 + $0x110] sm:$0xf]
        %v532 = vld [vmem:[%s1 + $0x114] sm:$0xf]
        %v533 = vld [vmem:[%s1 + $0x118] sm:$0xf]
        %v534 = vld [vmem:[%s1 + $0x11c] sm:$0xf]
        %v535 = vld [vmem:[%s1 + $0x120] sm:$0xf]
        %v536 = vld [vmem:[%s1 + $0x124] sm:$0xf]
        %v537 = vld [vmem:[%s1 + $0x128] sm:$0xf]
        %v538 = vld [vmem:[%s1 + $0x12c] sm:$0xf]
        %v539 = vld [vmem:[%s1 + $0x130] sm:$0xf]
        %v540 = vld [vmem:[%s1 + $0x134] sm:$0xf]
        %v541 = vld [vmem:[%s1 + $0x138] sm:$0xf]
        %v542 = vld [vmem:[%s1 + $0x13c] sm:$0xf]
        %v543 = vld [vmem:[%s1 + $0x140] sm:$0xf]
        %v544 = vld [vmem:[%s1 + $0x144] sm:$0xf]
        %v545 = vld [vmem:[%s1 + $0x148] sm:$0xf]
        %v546 = vld [vmem:[%s1 + $0x14c] sm:$0xf]
        %v547 = vld [vmem:[%s1 + $0x150] sm:$0xf]
        %v548 = vld [vmem:[%s1 + $0x154] sm:$0xf]
        %v549 = vld [vmem:[%s1 + $0x158] sm:$0xf]
        %v550 = vld [vmem:[%s1 + $0x15c] sm:$0xf]
        %v551 = vld [vmem:[%s1 + $0x160] sm:$0xf]
        %v552 = vld [vmem:[%s1 + $0x164] sm:$0xf]
        %v553 = vld [vmem:[%s1 + $0x168] sm:$0xf]
        %v554 = vld [vmem:[%s1 + $0x16c] sm:$0xf]
        %v555 = vld [vmem:[%s1 + $0x170] sm:$0xf]
        %v556 = vld [vmem:[%s1 + $0x174] sm:$0xf]
        %v557 = vld [vmem:[%s1 + $0x178] sm:$0xf]
        %v558 = vld [vmem:[%s1 + $0x17c] sm:$0xf]
        %v559 = vld [vmem:[%s1 + $0x180] sm:$0xf]
        %v560 = vld [vmem:[%s1 + $0x184] sm:$0xf]
        %v561 = vld [vmem:[%s2] sm:$0x1]
        %v563 = vperm.slane %v561, 0
        %v663 = vunpack.c.l.b16 %v463
        %v664 = vunpack.c.l.b16 %v464
        %v665 = vunpack.c.l.b16 %v465
        %v666 = vunpack.c.l.b16 %v466
        %v667 = vunpack.c.l.b16 %v467
        %v668 = vunpack.c.l.b16 %v468
        %v669 = vunpack.c.l.b16 %v469
        %v670 = vunpack.c.l.b16 %v470
        %v671 = vunpack.c.l.b16 %v471
        %v672 = vunpack.c.l.b16 %v472
        %v673 = vunpack.c.l.b16 %v473
        %v674 = vunpack.c.l.b16 %v474
        %v675 = vunpack.c.l.b16 %v475
        %v676 = vunpack.c.l.b16 %v476
        %v677 = vunpack.c.l.b16 %v477
        %v678 = vunpack.c.l.b16 %v478
        %v679 = vunpack.c.l.b16 %v479
        %v680 = vunpack.c.l.b16 %v480
        %v681 = vunpack.c.l.b16 %v481
        %v682 = vunpack.c.l.b16 %v482
        %v683 = vunpack.c.l.b16 %v483
        %v684 = vunpack.c.l.b16 %v484
        %v685 = vunpack.c.l.b16 %v485
        %v686 = vunpack.c.l.b16 %v486
        %v687 = vunpack.c.l.b16 %v487
        %v688 = vunpack.c.l.b16 %v488
        %v689 = vunpack.c.l.b16 %v489
        %v690 = vunpack.c.l.b16 %v490
        %v691 = vunpack.c.l.b16 %v491
        %v692 = vunpack.c.l.b16 %v492
        %v693 = vunpack.c.l.b16 %v493
        %v694 = vunpack.c.l.b16 %v494
        %v695 = vunpack.c.l.b16 %v495
        %v696 = vunpack.c.l.b16 %v496
        %v697 = vunpack.c.l.b16 %v497
        %v698 = vunpack.c.l.b16 %v498
        %v699 = vunpack.c.l.b16 %v499
        %v700 = vunpack.c.l.b16 %v500
        %v701 = vunpack.c.l.b16 %v501
        %v702 = vunpack.c.l.b16 %v502
        %v703 = vunpack.c.l.b16 %v503
        %v704 = vunpack.c.l.b16 %v504
        %v705 = vunpack.c.l.b16 %v505
        %v706 = vunpack.c.l.b16 %v506
        %v707 = vunpack.c.l.b16 %v507
        %v708 = vunpack.c.l.b16 %v508
        %v709 = vunpack.c.l.b16 %v509
        %v710 = vunpack.c.l.b16 %v510
        %v711 = vunpack.c.l.b16 %v511
        %v712 = vunpack.c.l.b16 %v512
        %v713 = vunpack.c.l.b16 %v513
        %v714 = vunpack.c.l.b16 %v514
        %v715 = vunpack.c.l.b16 %v515
        %v716 = vunpack.c.l.b16 %v516
        %v717 = vunpack.c.l.b16 %v517
        %v718 = vunpack.c.l.b16 %v518
        %v719 = vunpack.c.l.b16 %v519
        %v720 = vunpack.c.l.b16 %v520
        %v721 = vunpack.c.l.b16 %v521
        %v722 = vunpack.c.l.b16 %v522
        %v723 = vunpack.c.l.b16 %v523
        %v724 = vunpack.c.l.b16 %v524
        %v725 = vunpack.c.l.b16 %v525
        %v726 = vunpack.c.l.b16 %v526
        %v727 = vunpack.c.l.b16 %v527
        %v728 = vunpack.c.l.b16 %v528
        %v729 = vunpack.c.l.b16 %v529
        %v730 = vunpack.c.l.b16 %v530
        %v731 = vunpack.c.l.b16 %v531
        %v732 = vunpack.c.l.b16 %v532
        %v733 = vunpack.c.l.b16 %v533
        %v734 = vunpack.c.l.b16 %v534
        %v735 = vunpack.c.l.b16 %v535
        %v736 = vunpack.c.l.b16 %v536
        %v737 = vunpack.c.l.b16 %v537
        %v738 = vunpack.c.l.b16 %v538
        %v739 = vunpack.c.l.b16 %v539
        %v740 = vunpack.c.l.b16 %v540
        %v741 = vunpack.c.l.b16 %v541
        %v742 = vunpack.c.l.b16 %v542
        %v743 = vunpack.c.l.b16 %v543
        %v744 = vunpack.c.l.b16 %v544
        %v745 = vunpack.c.l.b16 %v545
        %v746 = vunpack.c.l.b16 %v546
        %v747 = vunpack.c.l.b16 %v547
        %v748 = vunpack.c.l.b16 %v548
        %v749 = vunpack.c.l.b16 %v549
        %v750 = vunpack.c.l.b16 %v550
        %v751 = vunpack.c.l.b16 %v551
        %v752 = vunpack.c.l.b16 %v552
        %v753 = vunpack.c.l.b16 %v553
        %v754 = vunpack.c.l.b16 %v554
        %v755 = vunpack.c.l.b16 %v555
        %v756 = vunpack.c.l.b16 %v556
        %v757 = vunpack.c.l.b16 %v557
        %v758 = vunpack.c.l.b16 %v558
        %v759 = vunpack.c.l.b16 %v559
        %v760 = vunpack.c.l.b16 %v560
        %v761 = vpack.c.b16 %v664, %v663
        %v762 = vpack.c.b16 %v666, %v665
        %v763 = vpack.c.b16 %v668, %v667
        %v764 = vpack.c.b16 %v670, %v669
        %v765 = vpack.c.b16 %v672, %v671
        %v766 = vpack.c.b16 %v674, %v673
        %v767 = vpack.c.b16 %v676, %v675
        %v768 = vpack.c.b16 %v678, %v677
        %v769 = vpack.c.b16 %v680, %v679
        %v770 = vpack.c.b16 %v682, %v681
        %v771 = vpack.c.b16 %v684, %v683
        %v772 = vpack.c.b16 %v686, %v685
        %v773 = vpack.c.b16 %v688, %v687
        %v774 = vpack.c.b16 %v690, %v689
        %v775 = vpack.c.b16 %v692, %v691
        %v776 = vpack.c.b16 %v694, %v693
        %v777 = vpack.c.b16 %v696, %v695
        %v778 = vpack.c.b16 %v698, %v697
        %v779 = vpack.c.b16 %v700, %v699
        %v780 = vpack.c.b16 %v702, %v701
        %v781 = vpack.c.b16 %v704, %v703
        %v782 = vpack.c.b16 %v706, %v705
        %v783 = vpack.c.b16 %v708, %v707
        %v784 = vpack.c.b16 %v710, %v709
        %v785 = vpack.c.b16 %v712, %v711
        %v786 = vpack.c.b16 %v714, %v713
        %v787 = vpack.c.b16 %v716, %v715
        %v788 = vpack.c.b16 %v718, %v717
        %v789 = vpack.c.b16 %v720, %v719
        %v790 = vpack.c.b16 %v722, %v721
        %v791 = vpack.c.b16 %v724, %v723
        %v792 = vpack.c.b16 %v726, %v725
        %v793 = vpack.c.b16 %v728, %v727
        %v794 = vpack.c.b16 %v730, %v729
        %v795 = vpack.c.b16 %v732, %v731
        %v796 = vpack.c.b16 %v734, %v733
        %v797 = vpack.c.b16 %v736, %v735
        %v798 = vpack.c.b16 %v738, %v737
        %v799 = vpack.c.b16 %v740, %v739
        %v800 = vpack.c.b16 %v742, %v741
        %v801 = vpack.c.b16 %v744, %v743
        %v802 = vpack.c.b16 %v746, %v745
        %v803 = vpack.c.b16 %v748, %v747
        %v804 = vpack.c.b16 %v750, %v749
        %v805 = vpack.c.b16 %v752, %v751
        %v806 = vpack.c.b16 %v754, %v753
        %v807 = vpack.c.b16 %v756, %v755
        %v808 = vpack.c.b16 %v758, %v757
        %v809 = vpack.c.b16 %v760, %v759
        %vm859 = vcmask 130048
        %v861 = vsel %vm859, %v420, 0
        %v864 = vsel %vm859, %v427, 0
        %v867 = vsel %vm859, %v434, 0
        %v870 = vsel %vm859, %v441, 0
        %v873 = vsel %vm859, %v448, 0
        %v876 = vsel %vm859, %v455, 0
        %v879 = vsel %vm859, %v462, 0
        %881 = vmatpush.bf16.msra.mxu0 %v768
        %882 = vmatpush.bf16.msra.mxu0 %v767
        %883 = vmatpush.bf16.msra.mxu0 %v766
        %884 = vmatpush.bf16.msra.mxu0 %v765
        %885 = vmatpush.bf16.msra.mxu0 %v764
        %886 = vmatpush.bf16.msra.mxu0 %v763
        %887 = vmatpush.bf16.msra.mxu0 %v762
        %888 = vmatpush.bf16.msra.mxu0 %v761
        %889 = vmatmul.bf16.gmra.mxu0 %v414
        %v890 = vpop.f32.mrf.mxu0
        %v891 = vadd.f32 %v563, %v890
        %v892 = vpop.f32.mrf.mxu0
        %v893 = vadd.f32 %v563, %v892
        %894 = vmatmul.bf16.gmra.mxu0 %v421
        %v895 = vpop.f32.mrf.mxu0
        %v896 = vadd.f32 %v563, %v895
        %v897 = vpop.f32.mrf.mxu0
        %v898 = vadd.f32 %v563, %v897
        %899 = vmatmul.bf16.gmra.mxu0 %v428
        %v900 = vpop.f32.mrf.mxu0
        %v901 = vadd.f32 %v563, %v900
        %v902 = vpop.f32.mrf.mxu0
        %v903 = vadd.f32 %v563, %v902
        %904 = vmatmul.bf16.gmra.mxu0 %v435
        %v905 = vpop.f32.mrf.mxu0
        %v906 = vadd.f32 %v563, %v905
        %v907 = vpop.f32.mrf.mxu0
        %v908 = vadd.f32 %v563, %v907
        %909 = vmatmul.bf16.gmra.mxu0 %v442
        %v910 = vpop.f32.mrf.mxu0
        %v911 = vadd.f32 %v563, %v910
        %v912 = vpop.f32.mrf.mxu0
        %v913 = vadd.f32 %v563, %v912
        %914 = vmatmul.bf16.gmra.mxu0 %v449
        %v915 = vpop.f32.mrf.mxu0
        %v916 = vadd.f32 %v563, %v915
        %v917 = vpop.f32.mrf.mxu0
        %v918 = vadd.f32 %v563, %v917
        %919 = vmatmul.bf16.gmra.mxu0 %v456
        %v920 = vpop.f32.mrf.mxu0
        %v921 = vadd.f32 %v563, %v920
        %v922 = vpop.f32.mrf.mxu0
        %v923 = vadd.f32 %v563, %v922
        %924 = vdwg.mxu0
        %925 = vmatpush.bf16.msra.mxu0 %v776
        %926 = vmatpush.bf16.msra.mxu0 %v775
        %927 = vmatpush.bf16.msra.mxu0 %v774
        %928 = vmatpush.bf16.msra.mxu0 %v773
        %929 = vmatpush.bf16.msra.mxu0 %v772
        %930 = vmatpush.bf16.msra.mxu0 %v771
        %931 = vmatpush.bf16.msra.mxu0 %v770
        %932 = vmatpush.bf16.msra.mxu0 %v769
        %933 = vmatmul.bf16.gmra.mxu0 %v415
        %v934 = vpop.f32.mrf.mxu0
        %v935 = vadd.f32 %v891, %v934
        %v936 = vpop.f32.mrf.mxu0
        %v937 = vadd.f32 %v893, %v936
        %938 = vmatmul.bf16.gmra.mxu0 %v422
        %v939 = vpop.f32.mrf.mxu0
        %v940 = vadd.f32 %v896, %v939
        %v941 = vpop.f32.mrf.mxu0
        %v942 = vadd.f32 %v898, %v941
        %943 = vmatmul.bf16.gmra.mxu0 %v429
        %v944 = vpop.f32.mrf.mxu0
        %v945 = vadd.f32 %v901, %v944
        %v946 = vpop.f32.mrf.mxu0
        %v947 = vadd.f32 %v903, %v946
        %948 = vmatmul.bf16.gmra.mxu0 %v436
        %v949 = vpop.f32.mrf.mxu0
        %v950 = vadd.f32 %v906, %v949
        %v951 = vpop.f32.mrf.mxu0
        %v952 = vadd.f32 %v908, %v951
        %953 = vmatmul.bf16.gmra.mxu0 %v443
        %v954 = vpop.f32.mrf.mxu0
        %v955 = vadd.f32 %v911, %v954
        %v956 = vpop.f32.mrf.mxu0
        %v957 = vadd.f32 %v913, %v956
        %958 = vmatmul.bf16.gmra.mxu0 %v450
        %v959 = vpop.f32.mrf.mxu0
        %v960 = vadd.f32 %v916, %v959
        %v961 = vpop.f32.mrf.mxu0
        %v962 = vadd.f32 %v918, %v961
        %963 = vmatmul.bf16.gmra.mxu0 %v457
        %v964 = vpop.f32.mrf.mxu0
        %v965 = vadd.f32 %v921, %v964
        %v966 = vpop.f32.mrf.mxu0
        %v967 = vadd.f32 %v923, %v966
        %968 = vdwg.mxu0
        %969 = vmatpush.bf16.msra.mxu0 %v784
        %970 = vmatpush.bf16.msra.mxu0 %v783
        %971 = vmatpush.bf16.msra.mxu0 %v782
        %972 = vmatpush.bf16.msra.mxu0 %v781
        %973 = vmatpush.bf16.msra.mxu0 %v780
        %974 = vmatpush.bf16.msra.mxu0 %v779
        %975 = vmatpush.bf16.msra.mxu0 %v778
        %976 = vmatpush.bf16.msra.mxu0 %v777
        %977 = vmatmul.bf16.gmra.mxu0 %v416
        %v978 = vpop.f32.mrf.mxu0
        %v979 = vadd.f32 %v935, %v978
        %v980 = vpop.f32.mrf.mxu0
        %v981 = vadd.f32 %v937, %v980
        %982 = vmatmul.bf16.gmra.mxu0 %v423
        %v983 = vpop.f32.mrf.mxu0
        %v984 = vadd.f32 %v940, %v983
        %v985 = vpop.f32.mrf.mxu0
        %v986 = vadd.f32 %v942, %v985
        %987 = vmatmul.bf16.gmra.mxu0 %v430
        %v988 = vpop.f32.mrf.mxu0
        %v989 = vadd.f32 %v945, %v988
        %v990 = vpop.f32.mrf.mxu0
        %v991 = vadd.f32 %v947, %v990
        %992 = vmatmul.bf16.gmra.mxu0 %v437
        %v993 = vpop.f32.mrf.mxu0
        %v994 = vadd.f32 %v950, %v993
        %v995 = vpop.f32.mrf.mxu0
        %v996 = vadd.f32 %v952, %v995
        %997 = vmatmul.bf16.gmra.mxu0 %v444
        %v998 = vpop.f32.mrf.mxu0
        %v999 = vadd.f32 %v955, %v998
        %v1000 = vpop.f32.mrf.mxu0
        %v1001 = vadd.f32 %v957, %v1000
        %1002 = vmatmul.bf16.gmra.mxu0 %v451
        %v1003 = vpop.f32.mrf.mxu0
        %v1004 = vadd.f32 %v960, %v1003
        %v1005 = vpop.f32.mrf.mxu0
        %v1006 = vadd.f32 %v962, %v1005
        %1007 = vmatmul.bf16.gmra.mxu0 %v458
        %v1008 = vpop.f32.mrf.mxu0
        %v1009 = vadd.f32 %v965, %v1008
        %v1010 = vpop.f32.mrf.mxu0
        %v1011 = vadd.f32 %v967, %v1010
        %1012 = vdwg.mxu0
        %1013 = vmatpush.bf16.msra.mxu0 %v792
        %1014 = vmatpush.bf16.msra.mxu0 %v791
        %1015 = vmatpush.bf16.msra.mxu0 %v790
        %1016 = vmatpush.bf16.msra.mxu0 %v789
        %1017 = vmatpush.bf16.msra.mxu0 %v788
        %1018 = vmatpush.bf16.msra.mxu0 %v787
        %1019 = vmatpush.bf16.msra.mxu0 %v786
        %1020 = vmatpush.bf16.msra.mxu0 %v785
        %1021 = vmatmul.bf16.gmra.mxu0 %v417
        %v1022 = vpop.f32.mrf.mxu0
        %v1023 = vadd.f32 %v979, %v1022
        %v1024 = vpop.f32.mrf.mxu0
        %v1025 = vadd.f32 %v981, %v1024
        %1026 = vmatmul.bf16.gmra.mxu0 %v424
        %v1027 = vpop.f32.mrf.mxu0
        %v1028 = vadd.f32 %v984, %v1027
        %v1029 = vpop.f32.mrf.mxu0
        %v1030 = vadd.f32 %v986, %v1029
        %1031 = vmatmul.bf16.gmra.mxu0 %v431
        %v1032 = vpop.f32.mrf.mxu0
        %v1033 = vadd.f32 %v989, %v1032
        %v1034 = vpop.f32.mrf.mxu0
        %v1035 = vadd.f32 %v991, %v1034
        %1036 = vmatmul.bf16.gmra.mxu0 %v438
        %v1037 = vpop.f32.mrf.mxu0
        %v1038 = vadd.f32 %v994, %v1037
        %v1039 = vpop.f32.mrf.mxu0
        %v1040 = vadd.f32 %v996, %v1039
        %1041 = vmatmul.bf16.gmra.mxu0 %v445
        %v1042 = vpop.f32.mrf.mxu0
        %v1043 = vadd.f32 %v999, %v1042
        %v1044 = vpop.f32.mrf.mxu0
        %v1045 = vadd.f32 %v1001, %v1044
        %1046 = vmatmul.bf16.gmra.mxu0 %v452
        %v1047 = vpop.f32.mrf.mxu0
        %v1048 = vadd.f32 %v1004, %v1047
        %v1049 = vpop.f32.mrf.mxu0
        %v1050 = vadd.f32 %v1006, %v1049
        %1051 = vmatmul.bf16.gmra.mxu0 %v459
        %v1052 = vpop.f32.mrf.mxu0
        %v1053 = vadd.f32 %v1009, %v1052
        %v1054 = vpop.f32.mrf.mxu0
        %v1055 = vadd.f32 %v1011, %v1054
        %1056 = vdwg.mxu0
        %1057 = vmatpush.bf16.msra.mxu0 %v800
        %1058 = vmatpush.bf16.msra.mxu0 %v799
        %1059 = vmatpush.bf16.msra.mxu0 %v798
        %1060 = vmatpush.bf16.msra.mxu0 %v797
        %1061 = vmatpush.bf16.msra.mxu0 %v796
        %1062 = vmatpush.bf16.msra.mxu0 %v795
        %1063 = vmatpush.bf16.msra.mxu0 %v794
        %1064 = vmatpush.bf16.msra.mxu0 %v793
        %1065 = vmatmul.bf16.gmra.mxu0 %v418
        %v1066 = vpop.f32.mrf.mxu0
        %v1067 = vadd.f32 %v1023, %v1066
        %v1068 = vpop.f32.mrf.mxu0
        %v1069 = vadd.f32 %v1025, %v1068
        %1070 = vmatmul.bf16.gmra.mxu0 %v425
        %v1071 = vpop.f32.mrf.mxu0
        %v1072 = vadd.f32 %v1028, %v1071
        %v1073 = vpop.f32.mrf.mxu0
        %v1074 = vadd.f32 %v1030, %v1073
        %1075 = vmatmul.bf16.gmra.mxu0 %v432
        %v1076 = vpop.f32.mrf.mxu0
        %v1077 = vadd.f32 %v1033, %v1076
        %v1078 = vpop.f32.mrf.mxu0
        %v1079 = vadd.f32 %v1035, %v1078
        %1080 = vmatmul.bf16.gmra.mxu0 %v439
        %v1081 = vpop.f32.mrf.mxu0
        %v1082 = vadd.f32 %v1038, %v1081
        %v1083 = vpop.f32.mrf.mxu0
        %v1084 = vadd.f32 %v1040, %v1083
        %1085 = vmatmul.bf16.gmra.mxu0 %v446
        %v1086 = vpop.f32.mrf.mxu0
        %v1087 = vadd.f32 %v1043, %v1086
        %v1088 = vpop.f32.mrf.mxu0
        %v1089 = vadd.f32 %v1045, %v1088
        %1090 = vmatmul.bf16.gmra.mxu0 %v453
        %v1091 = vpop.f32.mrf.mxu0
        %v1092 = vadd.f32 %v1048, %v1091
        %v1093 = vpop.f32.mrf.mxu0
        %v1094 = vadd.f32 %v1050, %v1093
        %1095 = vmatmul.bf16.gmra.mxu0 %v460
        %v1096 = vpop.f32.mrf.mxu0
        %v1097 = vadd.f32 %v1053, %v1096
        %v1098 = vpop.f32.mrf.mxu0
        %v1099 = vadd.f32 %v1055, %v1098
        %1100 = vdwg.mxu0
        %1101 = vmatpush.bf16.msra.mxu0 %v808
        %1102 = vmatpush.bf16.msra.mxu0 %v807
        %1103 = vmatpush.bf16.msra.mxu0 %v806
        %1104 = vmatpush.bf16.msra.mxu0 %v805
        %1105 = vmatpush.bf16.msra.mxu0 %v804
        %1106 = vmatpush.bf16.msra.mxu0 %v803
        %1107 = vmatpush.bf16.msra.mxu0 %v802
        %1108 = vmatpush.bf16.msra.mxu0 %v801
        %1109 = vmatmul.bf16.gmra.mxu0 %v419
        %v1110 = vpop.f32.mrf.mxu0
        %v1111 = vadd.f32 %v1067, %v1110
        %v1112 = vpop.f32.mrf.mxu0
        %v1113 = vadd.f32 %v1069, %v1112
        %1114 = vmatmul.bf16.gmra.mxu0 %v426
        %v1115 = vpop.f32.mrf.mxu0
        %v1116 = vadd.f32 %v1072, %v1115
        %v1117 = vpop.f32.mrf.mxu0
        %v1118 = vadd.f32 %v1074, %v1117
        %1119 = vmatmul.bf16.gmra.mxu0 %v433
        %v1120 = vpop.f32.mrf.mxu0
        %v1121 = vadd.f32 %v1077, %v1120
        %v1122 = vpop.f32.mrf.mxu0
        %v1123 = vadd.f32 %v1079, %v1122
        %1124 = vmatmul.bf16.gmra.mxu0 %v440
        %v1125 = vpop.f32.mrf.mxu0
        %v1126 = vadd.f32 %v1082, %v1125
        %v1127 = vpop.f32.mrf.mxu0
        %v1128 = vadd.f32 %v1084, %v1127
        %1129 = vmatmul.bf16.gmra.mxu0 %v447
        %v1130 = vpop.f32.mrf.mxu0
        %v1131 = vadd.f32 %v1087, %v1130
        %v1132 = vpop.f32.mrf.mxu0
        %v1133 = vadd.f32 %v1089, %v1132
        %1134 = vmatmul.bf16.gmra.mxu0 %v454
        %v1135 = vpop.f32.mrf.mxu0
        %v1136 = vadd.f32 %v1092, %v1135
        %v1137 = vpop.f32.mrf.mxu0
        %v1138 = vadd.f32 %v1094, %v1137
        %1139 = vmatmul.bf16.gmra.mxu0 %v461
        %v1140 = vpop.f32.mrf.mxu0
        %v1141 = vadd.f32 %v1097, %v1140
        %v1142 = vpop.f32.mrf.mxu0
        %v1143 = vadd.f32 %v1099, %v1142
        %1144 = vdwg.mxu0
        %1145 = vmatpush.bf16.msra.mxu0 0
        %1146 = vmatpush.bf16.msra.mxu0 0
        %1147 = vmatpush.bf16.msra.mxu0 0
        %1148 = vmatpush.bf16.msra.mxu0 0
        %1149 = vmatpush.bf16.msra.mxu0 0
        %1150 = vmatpush.bf16.msra.mxu0 0
        %1151 = vmatpush.bf16.msra.mxu0 0
        %1152 = vmatpush.bf16.msra.mxu0 %v809
        %1153 = vmatmul.bf16.gmra.mxu0 %v861
        %v1154 = vpop.f32.mrf.mxu0
        %v1155 = vadd.f32 %v1111, %v1154
        %v1156 = vpop.f32.mrf.mxu0
        %v1157 = vadd.f32 %v1113, %v1156
        %1158 = vmatmul.bf16.gmra.mxu0 %v864
        %v1159 = vpop.f32.mrf.mxu0
        %v1160 = vadd.f32 %v1116, %v1159
        %v1161 = vpop.f32.mrf.mxu0
        %v1162 = vadd.f32 %v1118, %v1161
        %1163 = vmatmul.bf16.gmra.mxu0 %v867
        %v1164 = vpop.f32.mrf.mxu0
        %v1165 = vadd.f32 %v1121, %v1164
        %v1166 = vpop.f32.mrf.mxu0
        %v1167 = vadd.f32 %v1123, %v1166
        %1168 = vmatmul.bf16.gmra.mxu0 %v870
        %v1169 = vpop.f32.mrf.mxu0
        %v1170 = vadd.f32 %v1126, %v1169
        %v1171 = vpop.f32.mrf.mxu0
        %v1172 = vadd.f32 %v1128, %v1171
        %1173 = vmatmul.bf16.gmra.mxu0 %v873
        %v1174 = vpop.f32.mrf.mxu0
        %v1175 = vadd.f32 %v1131, %v1174
        %v1176 = vpop.f32.mrf.mxu0
        %v1177 = vadd.f32 %v1133, %v1176
        %1178 = vmatmul.bf16.gmra.mxu0 %v876
        %v1179 = vpop.f32.mrf.mxu0
        %v1180 = vadd.f32 %v1136, %v1179
        %v1181 = vpop.f32.mrf.mxu0
        %v1182 = vadd.f32 %v1138, %v1181
        %1183 = vmatmul.bf16.gmra.mxu0 %v879
        %v1184 = vpop.f32.mrf.mxu0
        %v1185 = vadd.f32 %v1141, %v1184
        %v1186 = vpop.f32.mrf.mxu0
        %v1187 = vadd.f32 %v1143, %v1186
        %1188 = vdwg.mxu0
        %v1189 = vtanh.pop %v1155
        %v1190 = vtanh.pop %v1157
        %v1191 = vtanh.pop %v1160
        %v1192 = vtanh.pop %v1162
        %v1193 = vtanh.pop %v1165
        %v1194 = vtanh.pop %v1167
        %v1195 = vtanh.pop %v1170
        %v1196 = vtanh.pop %v1172
        %v1197 = vtanh.pop %v1175
        %v1198 = vtanh.pop %v1177
        %v1199 = vtanh.pop %v1180
        %v1200 = vtanh.pop %v1182
        %v1201 = vtanh.pop %v1185
        %v1202 = vtanh.pop %v1187
        %v1203 = vpack.c.bf16 %v1190, %v1189
        %v1204 = vpack.c.bf16 %v1192, %v1191
        %v1205 = vpack.c.bf16 %v1194, %v1193
        %v1206 = vpack.c.bf16 %v1196, %v1195
        %v1207 = vpack.c.bf16 %v1198, %v1197
        %v1208 = vpack.c.bf16 %v1200, %v1199
        %v1209 = vpack.c.bf16 %v1202, %v1201
        %v1210 = vld [vmem:[%s3] sm:$0xf]
        %v1211 = vld [vmem:[%s3 + $0x4] sm:$0xf]
        %v1212 = vld [vmem:[%s3 + $0x8] sm:$0xf]
        %v1213 = vld [vmem:[%s3 + $0xc] sm:$0xf]
        %v1214 = vld [vmem:[%s3 + $0x10] sm:$0xf]
        %v1215 = vld [vmem:[%s3 + $0x14] sm:$0xf]
        %v1216 = vld [vmem:[%s3 + $0x18] sm:$0xf]
        %v1217 = vld [vmem:[%s3 + $0x1c] sm:$0xf]
        %v1218 = vld [vmem:[%s3 + $0x20] sm:$0xf]
        %v1219 = vld [vmem:[%s3 + $0x24] sm:$0xf]
        %v1220 = vld [vmem:[%s3 + $0x28] sm:$0xf]
        %v1221 = vld [vmem:[%s3 + $0x2c] sm:$0xf]
        %v1222 = vld [vmem:[%s3 + $0x30] sm:$0xf]
        %v1223 = vld [vmem:[%s3 + $0x34] sm:$0xf]
        %v1224 = vld [vmem:[%s3 + $0x38] sm:$0xf]
        %v1225 = vld [vmem:[%s3 + $0x3c] sm:$0xf]
        %v1226 = vld [vmem:[%s4] sm:$0x1]
        %v1228 = vperm.slane %v1226, 0
        %v1246 = vunpack.c.l.b16 %v1210
        %v1247 = vunpack.c.l.b16 %v1211
        %v1248 = vunpack.c.l.b16 %v1212
        %v1249 = vunpack.c.l.b16 %v1213
        %v1250 = vunpack.c.l.b16 %v1214
        %v1251 = vunpack.c.l.b16 %v1215
        %v1252 = vunpack.c.l.b16 %v1216
        %v1253 = vunpack.c.l.b16 %v1217
        %v1254 = vunpack.c.l.b16 %v1218
        %v1255 = vunpack.c.l.b16 %v1219
        %v1256 = vunpack.c.l.b16 %v1220
        %v1257 = vunpack.c.l.b16 %v1221
        %v1258 = vunpack.c.l.b16 %v1222
        %v1259 = vunpack.c.l.b16 %v1223
        %v1260 = vunpack.c.l.b16 %v1224
        %v1261 = vunpack.c.l.b16 %v1225
        %v1262 = vpack.c.b16 %v1247, %v1246
        %v1263 = vpack.c.b16 %v1249, %v1248
        %v1264 = vpack.c.b16 %v1251, %v1250
        %v1265 = vpack.c.b16 %v1253, %v1252
        %v1266 = vpack.c.b16 %v1255, %v1254
        %v1267 = vpack.c.b16 %v1257, %v1256
        %v1268 = vpack.c.b16 %v1259, %v1258
        %v1269 = vpack.c.b16 %v1261, %v1260
        %1278 = vmatpush.bf16.msra.mxu0 %v1269
        %1279 = vmatpush.bf16.msra.mxu0 %v1268
        %1280 = vmatpush.bf16.msra.mxu0 %v1267
        %1281 = vmatpush.bf16.msra.mxu0 %v1266
        %1282 = vmatpush.bf16.msra.mxu0 %v1265
        %1283 = vmatpush.bf16.msra.mxu0 %v1264
        %1284 = vmatpush.bf16.msra.mxu0 %v1263
        %1285 = vmatpush.bf16.msra.mxu0 %v1262
        %1286 = vmatmul.bf16.gmra.mxu0 %v1203
        %v1287 = vpop.f32.mrf.mxu0
        %v1288 = vadd.f32 %v1228, %v1287
        %v1289 = vpop.f32.mrf.mxu0
        %v1290 = vadd.f32 %v1228, %v1289
        %1291 = vmatmul.bf16.gmra.mxu0 %v1204
        %v1292 = vpop.f32.mrf.mxu0
        %v1293 = vadd.f32 %v1228, %v1292
        %v1294 = vpop.f32.mrf.mxu0
        %v1295 = vadd.f32 %v1228, %v1294
        %1296 = vmatmul.bf16.gmra.mxu0 %v1205
        %v1297 = vpop.f32.mrf.mxu0
        %v1298 = vadd.f32 %v1228, %v1297
        %v1299 = vpop.f32.mrf.mxu0
        %v1300 = vadd.f32 %v1228, %v1299
        %1301 = vmatmul.bf16.gmra.mxu0 %v1206
        %v1302 = vpop.f32.mrf.mxu0
        %v1303 = vadd.f32 %v1228, %v1302
        %v1304 = vpop.f32.mrf.mxu0
        %v1305 = vadd.f32 %v1228, %v1304
        %1306 = vmatmul.bf16.gmra.mxu0 %v1207
        %v1307 = vpop.f32.mrf.mxu0
        %v1308 = vadd.f32 %v1228, %v1307
        %v1309 = vpop.f32.mrf.mxu0
        %v1310 = vadd.f32 %v1228, %v1309
        %1311 = vmatmul.bf16.gmra.mxu0 %v1208
        %v1312 = vpop.f32.mrf.mxu0
        %v1313 = vadd.f32 %v1228, %v1312
        %v1314 = vpop.f32.mrf.mxu0
        %v1315 = vadd.f32 %v1228, %v1314
        %1316 = vmatmul.bf16.gmra.mxu0 %v1209
        %v1317 = vpop.f32.mrf.mxu0
        %v1318 = vadd.f32 %v1228, %v1317
        %v1319 = vpop.f32.mrf.mxu0
        %v1320 = vadd.f32 %v1228, %v1319
        %1321 = vdwg.mxu0
        %v1322 = vmul.f32 %v1288, 0.5
        %v1323 = vmul.f32 %v1290, 0.5
        %v1324 = vmul.f32 %v1293, 0.5
        %v1325 = vmul.f32 %v1295, 0.5
        %v1326 = vmul.f32 %v1298, 0.5
        %v1327 = vmul.f32 %v1300, 0.5
        %v1328 = vmul.f32 %v1303, 0.5
        %v1329 = vmul.f32 %v1305, 0.5
        %v1330 = vmul.f32 %v1308, 0.5
        %v1331 = vmul.f32 %v1310, 0.5
        %v1332 = vmul.f32 %v1313, 0.5
        %v1333 = vmul.f32 %v1315, 0.5
        %v1334 = vmul.f32 %v1318, 0.5
        %v1335 = vmul.f32 %v1320, 0.5
        %v1336 = vtanh.pop %v1322
        %v1337 = vtanh.pop %v1323
        %v1338 = vtanh.pop %v1324
        %v1339 = vtanh.pop %v1325
        %v1340 = vtanh.pop %v1326
        %v1341 = vtanh.pop %v1327
        %v1342 = vtanh.pop %v1328
        %v1343 = vtanh.pop %v1329
        %v1344 = vtanh.pop %v1330
        %v1345 = vtanh.pop %v1331
        %v1346 = vtanh.pop %v1332
        %v1347 = vtanh.pop %v1333
        %v1348 = vtanh.pop %v1334
        %v1349 = vtanh.pop %v1335
        %v1350 = vadd.f32 %v1336, 1.0
        %v1351 = vadd.f32 %v1337, 1.0
        %v1352 = vadd.f32 %v1338, 1.0
        %v1353 = vadd.f32 %v1339, 1.0
        %v1354 = vadd.f32 %v1340, 1.0
        %v1355 = vadd.f32 %v1341, 1.0
        %v1356 = vadd.f32 %v1342, 1.0
        %v1357 = vadd.f32 %v1343, 1.0
        %v1358 = vadd.f32 %v1344, 1.0
        %v1359 = vadd.f32 %v1345, 1.0
        %v1360 = vadd.f32 %v1346, 1.0
        %v1361 = vadd.f32 %v1347, 1.0
        %v1362 = vadd.f32 %v1348, 1.0
        %v1363 = vadd.f32 %v1349, 1.0
        %v1364 = vmul.f32 %v1350, 0.5
        %v1365 = vmul.f32 %v1351, 0.5
        %v1366 = vmul.f32 %v1352, 0.5
        %v1367 = vmul.f32 %v1353, 0.5
        %v1368 = vmul.f32 %v1354, 0.5
        %v1369 = vmul.f32 %v1355, 0.5
        %v1370 = vmul.f32 %v1356, 0.5
        %v1371 = vmul.f32 %v1357, 0.5
        %v1372 = vmul.f32 %v1358, 0.5
        %v1373 = vmul.f32 %v1359, 0.5
        %v1374 = vmul.f32 %v1360, 0.5
        %v1375 = vmul.f32 %v1361, 0.5
        %v1376 = vmul.f32 %v1362, 0.5
        %v1377 = vmul.f32 %v1363, 0.5
        %v1378 = vpack.c.bf16 %v1365, %v1364
        %v1379 = vpack.c.bf16 %v1367, %v1366
        %v1380 = vpack.c.bf16 %v1369, %v1368
        %v1381 = vpack.c.bf16 %v1371, %v1370
        %v1382 = vpack.c.bf16 %v1373, %v1372
        %v1383 = vpack.c.bf16 %v1375, %v1374
        %v1384 = vpack.c.bf16 %v1377, %v1376
        %v1385 = vld [vmem:[%s5] sm:$0xf]
        %v1386 = vld [vmem:[%s5 + $0x4] sm:$0xf]
        %v1387 = vld [vmem:[%s5 + $0x8] sm:$0xf]
        %v1388 = vld [vmem:[%s5 + $0xc] sm:$0xf]
        %v1389 = vld [vmem:[%s6] sm:$0x1]
        %v1391 = vperm.slane %v1389, 0
        %v1397 = vunpack.c.l.b16 %v1385
        %v1398 = vunpack.c.l.b16 %v1386
        %v1399 = vunpack.c.l.b16 %v1387
        %v1400 = vunpack.c.l.b16 %v1388
        %v1401 = vpack.c.b16 %v1398, %v1397
        %v1402 = vpack.c.b16 %v1400, %v1399
        %vm1405 = vcmask 261120
        %v1407 = vsel %vm1405, %v1378, 0
        %v1410 = vsel %vm1405, %v1379, 0
        %v1413 = vsel %vm1405, %v1380, 0
        %v1416 = vsel %vm1405, %v1381, 0
        %v1419 = vsel %vm1405, %v1382, 0
        %v1422 = vsel %vm1405, %v1383, 0
        %v1425 = vsel %vm1405, %v1384, 0
        %1427 = vmatpush.bf16.msra.mxu0 0
        %1428 = vmatpush.bf16.msra.mxu0 0
        %1429 = vmatpush.bf16.msra.mxu0 0
        %1430 = vmatpush.bf16.msra.mxu0 0
        %1431 = vmatpush.bf16.msra.mxu0 0
        %1432 = vmatpush.bf16.msra.mxu0 0
        %1433 = vmatpush.bf16.msra.mxu0 %v1402
        %1434 = vmatpush.bf16.msra.mxu0 %v1401
        %1435 = vmatmul.bf16.gmra.mxu0 %v1407
        %v1436 = vpop.f32.mrf.mxu0
        %v1437 = vadd.f32 %v1391, %v1436
        %v1438 = vpop.f32.mrf.mxu0
        %v1439 = vadd.f32 %v1391, %v1438
        %1440 = vmatmul.bf16.gmra.mxu0 %v1410
        %v1441 = vpop.f32.mrf.mxu0
        %v1442 = vadd.f32 %v1391, %v1441
        %v1443 = vpop.f32.mrf.mxu0
        %v1444 = vadd.f32 %v1391, %v1443
        %1445 = vmatmul.bf16.gmra.mxu0 %v1413
        %v1446 = vpop.f32.mrf.mxu0
        %v1447 = vadd.f32 %v1391, %v1446
        %v1448 = vpop.f32.mrf.mxu0
        %v1449 = vadd.f32 %v1391, %v1448
        %1450 = vmatmul.bf16.gmra.mxu0 %v1416
        %v1451 = vpop.f32.mrf.mxu0
        %v1452 = vadd.f32 %v1391, %v1451
        %v1453 = vpop.f32.mrf.mxu0
        %v1454 = vadd.f32 %v1391, %v1453
        %1455 = vmatmul.bf16.gmra.mxu0 %v1419
        %v1456 = vpop.f32.mrf.mxu0
        %v1457 = vadd.f32 %v1391, %v1456
        %v1458 = vpop.f32.mrf.mxu0
        %v1459 = vadd.f32 %v1391, %v1458
        %1460 = vmatmul.bf16.gmra.mxu0 %v1422
        %v1461 = vpop.f32.mrf.mxu0
        %v1462 = vadd.f32 %v1391, %v1461
        %v1463 = vpop.f32.mrf.mxu0
        %v1464 = vadd.f32 %v1391, %v1463
        %1465 = vmatmul.bf16.gmra.mxu0 %v1425
        %v1466 = vpop.f32.mrf.mxu0
        %v1467 = vadd.f32 %v1391, %v1466
        %v1468 = vpop.f32.mrf.mxu0
        %v1469 = vadd.f32 %v1391, %v1468
        %1470 = vdwg.mxu0
        %v1471 = vmul.f32 %v1437, 0.5
        %v1472 = vmul.f32 %v1439, 0.5
        %v1473 = vmul.f32 %v1442, 0.5
        %v1474 = vmul.f32 %v1444, 0.5
        %v1475 = vmul.f32 %v1447, 0.5
        %v1476 = vmul.f32 %v1449, 0.5
        %v1477 = vmul.f32 %v1452, 0.5
        %v1478 = vmul.f32 %v1454, 0.5
        %v1479 = vmul.f32 %v1457, 0.5
        %v1480 = vmul.f32 %v1459, 0.5
        %v1481 = vmul.f32 %v1462, 0.5
        %v1482 = vmul.f32 %v1464, 0.5
        %v1483 = vmul.f32 %v1467, 0.5
        %v1484 = vmul.f32 %v1469, 0.5
        %v1485 = vtanh.pop %v1471
        %v1486 = vtanh.pop %v1472
        %v1487 = vtanh.pop %v1473
        %v1488 = vtanh.pop %v1474
        %v1489 = vtanh.pop %v1475
        %v1490 = vtanh.pop %v1476
        %v1491 = vtanh.pop %v1477
        %v1492 = vtanh.pop %v1478
        %v1493 = vtanh.pop %v1479
        %v1494 = vtanh.pop %v1480
        %v1495 = vtanh.pop %v1481
        %v1496 = vtanh.pop %v1482
        %v1497 = vtanh.pop %v1483
        %v1498 = vtanh.pop %v1484
        %v1499 = vadd.f32 %v1485, 1.0
        %v1500 = vadd.f32 %v1486, 1.0
        %v1501 = vadd.f32 %v1487, 1.0
        %v1502 = vadd.f32 %v1488, 1.0
        %v1503 = vadd.f32 %v1489, 1.0
        %v1504 = vadd.f32 %v1490, 1.0
        %v1505 = vadd.f32 %v1491, 1.0
        %v1506 = vadd.f32 %v1492, 1.0
        %v1507 = vadd.f32 %v1493, 1.0
        %v1508 = vadd.f32 %v1494, 1.0
        %v1509 = vadd.f32 %v1495, 1.0
        %v1510 = vadd.f32 %v1496, 1.0
        %v1511 = vadd.f32 %v1497, 1.0
        %v1512 = vadd.f32 %v1498, 1.0
        %v1513 = vmul.f32 %v1499, 0.5
        %v1514 = vmul.f32 %v1500, 0.5
        %v1515 = vmul.f32 %v1501, 0.5
        %v1516 = vmul.f32 %v1502, 0.5
        %v1517 = vmul.f32 %v1503, 0.5
        %v1518 = vmul.f32 %v1504, 0.5
        %v1519 = vmul.f32 %v1505, 0.5
        %v1520 = vmul.f32 %v1506, 0.5
        %v1521 = vmul.f32 %v1507, 0.5
        %v1522 = vmul.f32 %v1508, 0.5
        %v1523 = vmul.f32 %v1509, 0.5
        %v1524 = vmul.f32 %v1510, 0.5
        %v1525 = vmul.f32 %v1511, 0.5
        %v1526 = vmul.f32 %v1512, 0.5
        %v1527 = vpack.c.bf16 %v1513, %v1513
        %v1528 = vpack.c.bf16 %v1514, %v1514
        %v1529 = vpack.c.bf16 %v1515, %v1515
        %v1530 = vpack.c.bf16 %v1516, %v1516
        %v1531 = vpack.c.bf16 %v1517, %v1517
        %v1532 = vpack.c.bf16 %v1518, %v1518
        %v1533 = vpack.c.bf16 %v1519, %v1519
        %v1534 = vpack.c.bf16 %v1520, %v1520
        %v1535 = vpack.c.bf16 %v1521, %v1521
        %v1536 = vpack.c.bf16 %v1522, %v1522
        %v1537 = vpack.c.bf16 %v1523, %v1523
        %v1538 = vpack.c.bf16 %v1524, %v1524
        %v1539 = vpack.c.bf16 %v1525, %v1525
        %v1540 = vpack.c.bf16 %v1526, %v1526
        %vm1541 = vcmask 76800
        %1542 = vst.msk [vmem:[%s303] sm:$0xf] %vm1541, %v1527
        %1543 = vst.msk [vmem:[%s303 + $0x4] sm:$0xf] %vm1541, %v1528
        %1544 = vst.msk [vmem:[%s303 + $0x8] sm:$0xf] %vm1541, %v1529
        %1545 = vst.msk [vmem:[%s303 + $0xc] sm:$0xf] %vm1541, %v1530
        %1546 = vst.msk [vmem:[%s303 + $0x10] sm:$0xf] %vm1541, %v1531
        %1547 = vst.msk [vmem:[%s303 + $0x14] sm:$0xf] %vm1541, %v1532
        %1548 = vst.msk [vmem:[%s303 + $0x18] sm:$0xf] %vm1541, %v1533
        %1549 = vst.msk [vmem:[%s303 + $0x1c] sm:$0xf] %vm1541, %v1534
        %1550 = vst.msk [vmem:[%s303 + $0x20] sm:$0xf] %vm1541, %v1535
        %1551 = vst.msk [vmem:[%s303 + $0x24] sm:$0xf] %vm1541, %v1536
        %1552 = vst.msk [vmem:[%s303 + $0x28] sm:$0xf] %vm1541, %v1537
        %1553 = vst.msk [vmem:[%s303 + $0x2c] sm:$0xf] %vm1541, %v1538
        %1554 = vst.msk [vmem:[%s303 + $0x30] sm:$0xf] %vm1541, %v1539
        %1555 = vst.msk [vmem:[%s303 + $0x34] sm:$0xf] %vm1541, %v1540
        %s1556 = sand.u32 %s181, 1
        %s1557 = sand.u32 %s181, 1
        %s1558 = smul.addr %s1557, 56
        %s1559 = scalar_lea.vmem [#allocation4], %s1558
        // Predicated region
        $region53: #{aec_forward.1} parent=47 // pred_check
          %p1560 = pneg %p191
        $region54: #{aec_forward.1} parent=47 // pred_check_branch
          %1562 = sbr.rel (%p1560) target = $region56
        $region55: #{aec_forward.1} parent=47 // pred_region
          %s1563 = smul.u32 14, %s21
          %s1564 = ssub.s32 25, %s1563
          %p1565 = scmp.lt.s32.totalorder %s1564, 14
          %s1566 = scalar_select %p1565, %s1564, 14
          %s1567 = smul.u32 4, %s1566
          %p1568 = scmp.ne.s32.totalorder 0, %s1567
          %s1569 = smul.addr %s1563, 4
          %s1570 = scalar_lea.vmem %s7, %s1569
          // Predicated region
          $region57: #{aec_forward.1} parent=55 // pred_check
            %p1571 = pneg %p1568
          $region58: #{aec_forward.1} parent=55 // pred_check_branch
            %1573 = sbr.rel (%p1571) target = $region60
          $region59: #{aec_forward.1} parent=55 // pred_region
            // Predicated region
            $region61: #{aec_forward.1} parent=59 // pred_check
              _
            $region62: #{aec_forward.1} parent=59 // pred_check_branch
              %1575 = sbr.rel target = $region64
            $region63: #{aec_forward.1} parent=59 // pred_region
              // Predicated region
              $region83: #{aec_forward.1} parent=63 // pred_check
                _
              $region84: #{aec_forward.1} parent=63 // pred_check_branch
                %1652 = sbr.rel (0) target = $region86
              $region85: #{aec_forward.1} parent=63 // pred_region
                %s1654 = ssub.s32 16, 1
                %s1655 = sdiv.u32.pop %s1566, 14
                %s1656 = srem.u32.pop %s1566, 14
                // While loop
                $region87: #{aec_forward.1} parent=85 // loop_pre_header
                  _
                $region88: #{aec_forward.1} parent=85 // loop_header
                  %s1658 = sphi 0, %s1660
                  %p1659 = scmp.ge.s32.totalorder %s1658, %s1655
                  %s1663 = sphi 0, %s1696
                  %s1664 = sphi %s1559, %s1699
                  %s1665 = sphi %s1570, %s1700
                $region89: #{aec_forward.1} parent=85 // loop_header_branch
                  %1662 = sbr.rel (%p1659) target = $region93
                $region90: #{aec_forward.1} parent=85 // loop_body
                  %v1666 = vld [vmem:[%s1664] sm:%s1654]
                  %1667 = vst [vmem:[%s1665] sm:%s1654] %v1666
                  %v1668 = vld [vmem:[%s1664 + $0x4] sm:%s1654]
                  %1669 = vst [vmem:[%s1665 + $0x4] sm:%s1654] %v1668
                  %v1670 = vld [vmem:[%s1664 + $0x8] sm:%s1654]
                  %1671 = vst [vmem:[%s1665 + $0x8] sm:%s1654] %v1670
                  %v1672 = vld [vmem:[%s1664 + $0xc] sm:%s1654]
                  %1673 = vst [vmem:[%s1665 + $0xc] sm:%s1654] %v1672
                  %v1674 = vld [vmem:[%s1664 + $0x10] sm:%s1654]
                  %1675 = vst [vmem:[%s1665 + $0x10] sm:%s1654] %v1674
                  %v1676 = vld [vmem:[%s1664 + $0x14] sm:%s1654]
                  %1677 = vst [vmem:[%s1665 + $0x14] sm:%s1654] %v1676
                  %v1678 = vld [vmem:[%s1664 + $0x18] sm:%s1654]
                  %1679 = vst [vmem:[%s1665 + $0x18] sm:%s1654] %v1678
                  %v1680 = vld [vmem:[%s1664 + $0x1c] sm:%s1654]
                  %1681 = vst [vmem:[%s1665 + $0x1c] sm:%s1654] %v1680
                  %v1682 = vld [vmem:[%s1664 + $0x20] sm:%s1654]
                  %1683 = vst [vmem:[%s1665 + $0x20] sm:%s1654] %v1682
                  %v1684 = vld [vmem:[%s1664 + $0x24] sm:%s1654]
                  %1685 = vst [vmem:[%s1665 + $0x24] sm:%s1654] %v1684
                  %v1686 = vld [vmem:[%s1664 + $0x28] sm:%s1654]
                  %1687 = vst [vmem:[%s1665 + $0x28] sm:%s1654] %v1686
                  %v1688 = vld [vmem:[%s1664 + $0x2c] sm:%s1654]
                  %1689 = vst [vmem:[%s1665 + $0x2c] sm:%s1654] %v1688
                  %v1690 = vld [vmem:[%s1664 + $0x30] sm:%s1654]
                  %1691 = vst [vmem:[%s1665 + $0x30] sm:%s1654] %v1690
                  %v1692 = vld [vmem:[%s1664 + $0x34] sm:%s1654]
                  %1693 = vst [vmem:[%s1665 + $0x34] sm:%s1654] %v1692
                  %s1694 = sadd.s32 1, %s1663
                  %p1695 = scmp.ge.s32.totalorder %s1694, %s1655
                  %s1696 = scalar_select %p1695, 0, %s1694
                  %s1697 = smul.u32 %s1696, 56
                  %s1698 = smul.u32 %s1696, 56
                  %s1699 = scalar_lea.vmem %s1559, %s1697 [#allocation4]
                  %s1700 = scalar_lea.vmem %s1570, %s1698
                $region91: #{aec_forward.1} parent=85 // loop_footer
                  %s1660 = sadd.s32 %s1658, 1
                $region92: #{aec_forward.1} parent=85 // loop_footer_branch
                  %1657 = sbr.rel target = $region88
                $region93: #{aec_forward.1} parent=85 // loop_exit
                  _
                %s1701 = sdiv.u32.pop %s1566, 14
                %s1702 = srem.u32.pop %s1566, 14
                %s1703 = smul.u32 %s1701, 14
                %s1704 = smul.u32 4, %s1703
                %s1705 = scalar_lea.vmem %s1559, %s1704 [#allocation4]
                %s1706 = smul.u32 4, %s1703
                %s1707 = scalar_lea.vmem %s1570, %s1706
                // While loop
                $region94: #{aec_forward.1} parent=85 // loop_pre_header
                  _
                $region95: #{aec_forward.1} parent=85 // loop_header
                  %s1709 = sphi 0, %s1711
                  %p1710 = scmp.ge.s32.totalorder %s1709, %s1702
                  %s1714 = sphi 0, %s1721
                  %s1715 = sphi %s1705, %s1724
                  %s1716 = sphi %s1707, %s1725
                $region96: #{aec_forward.1} parent=85 // loop_header_branch
                  %1713 = sbr.rel (%p1710) target = $region100
                $region97: #{aec_forward.1} parent=85 // loop_body
                  %v1717 = vld [vmem:[%s1715] sm:%s1654]
                  %1718 = vst [vmem:[%s1716] sm:%s1654] %v1717
                  %s1719 = sadd.s32 1, %s1714
                  %p1720 = scmp.ge.s32.totalorder %s1719, %s1702
                  %s1721 = scalar_select %p1720, 0, %s1719
                  %s1722 = smul.u32 %s1721, 4
                  %s1723 = smul.u32 %s1721, 4
                  %s1724 = scalar_lea.vmem %s1705, %s1722 [#allocation4]
                  %s1725 = scalar_lea.vmem %s1707, %s1723
                $region98: #{aec_forward.1} parent=85 // loop_footer
                  %s1711 = sadd.s32 %s1709, 1
                $region99: #{aec_forward.1} parent=85 // loop_footer_branch
                  %1708 = sbr.rel target = $region95
                $region100: #{aec_forward.1} parent=85 // loop_exit
                  _
              $region86: #{aec_forward.1} parent=63 // pred_fallthru
                _
            $region64: #{aec_forward.1} parent=59 // pred_fallthru
              _
            // Predicated region
            $region65: #{aec_forward.1} parent=59 // pred_check
              _
            $region66: #{aec_forward.1} parent=59 // pred_check_branch
              %1577 = sbr.rel (0) target = $region68
            $region67: #{aec_forward.1} parent=59 // pred_region
              %s1579 = ssub.s32 16, 1
              %s1580 = sdiv.u32.pop %s1566, 14
              %s1581 = srem.u32.pop %s1566, 14
              // While loop
              $region69: #{aec_forward.1} parent=67 // loop_pre_header
                _
              $region70: #{aec_forward.1} parent=67 // loop_header
                %s1583 = sphi 0, %s1585
                %p1584 = scmp.ge.s32.totalorder %s1583, %s1580
                %s1588 = sphi 0, %s1621
                %s1589 = sphi %s1559, %s1624
                %s1590 = sphi %s1570, %s1625
              $region71: #{aec_forward.1} parent=67 // loop_header_branch
                %1587 = sbr.rel (%p1584) target = $region75
              $region72: #{aec_forward.1} parent=67 // loop_body
                %v1591 = vld [vmem:[%s1589] sm:%s1579]
                %1592 = vst [vmem:[%s1590] sm:%s1579] %v1591
                %v1593 = vld [vmem:[%s1589 + $0x4] sm:%s1579]
                %1594 = vst [vmem:[%s1590 + $0x4] sm:%s1579] %v1593
                %v1595 = vld [vmem:[%s1589 + $0x8] sm:%s1579]
                %1596 = vst [vmem:[%s1590 + $0x8] sm:%s1579] %v1595
                %v1597 = vld [vmem:[%s1589 + $0xc] sm:%s1579]
                %1598 = vst [vmem:[%s1590 + $0xc] sm:%s1579] %v1597
                %v1599 = vld [vmem:[%s1589 + $0x10] sm:%s1579]
                %1600 = vst [vmem:[%s1590 + $0x10] sm:%s1579] %v1599
                %v1601 = vld [vmem:[%s1589 + $0x14] sm:%s1579]
                %1602 = vst [vmem:[%s1590 + $0x14] sm:%s1579] %v1601
                %v1603 = vld [vmem:[%s1589 + $0x18] sm:%s1579]
                %1604 = vst [vmem:[%s1590 + $0x18] sm:%s1579] %v1603
                %v1605 = vld [vmem:[%s1589 + $0x1c] sm:%s1579]
                %1606 = vst [vmem:[%s1590 + $0x1c] sm:%s1579] %v1605
                %v1607 = vld [vmem:[%s1589 + $0x20] sm:%s1579]
                %1608 = vst [vmem:[%s1590 + $0x20] sm:%s1579] %v1607
                %v1609 = vld [vmem:[%s1589 + $0x24] sm:%s1579]
                %1610 = vst [vmem:[%s1590 + $0x24] sm:%s1579] %v1609
                %v1611 = vld [vmem:[%s1589 + $0x28] sm:%s1579]
                %1612 = vst [vmem:[%s1590 + $0x28] sm:%s1579] %v1611
                %v1613 = vld [vmem:[%s1589 + $0x2c] sm:%s1579]
                %1614 = vst [vmem:[%s1590 + $0x2c] sm:%s1579] %v1613
                %v1615 = vld [vmem:[%s1589 + $0x30] sm:%s1579]
                %1616 = vst [vmem:[%s1590 + $0x30] sm:%s1579] %v1615
                %v1617 = vld [vmem:[%s1589 + $0x34] sm:%s1579]
                %1618 = vst [vmem:[%s1590 + $0x34] sm:%s1579] %v1617
                %s1619 = sadd.s32 1, %s1588
                %p1620 = scmp.ge.s32.totalorder %s1619, %s1580
                %s1621 = scalar_select %p1620, 0, %s1619
                %s1622 = smul.u32 %s1621, 56
                %s1623 = smul.u32 %s1621, 56
                %s1624 = scalar_lea.vmem %s1559, %s1622 [#allocation4]
                %s1625 = scalar_lea.vmem %s1570, %s1623
              $region73: #{aec_forward.1} parent=67 // loop_footer
                %s1585 = sadd.s32 %s1583, 1
              $region74: #{aec_forward.1} parent=67 // loop_footer_branch
                %1582 = sbr.rel target = $region70
              $region75: #{aec_forward.1} parent=67 // loop_exit
                _
              %s1626 = sdiv.u32.pop %s1566, 14
              %s1627 = srem.u32.pop %s1566, 14
              %s1628 = smul.u32 %s1626, 14
              %s1629 = smul.u32 4, %s1628
              %s1630 = scalar_lea.vmem %s1559, %s1629 [#allocation4]
              %s1631 = smul.u32 4, %s1628
              %s1632 = scalar_lea.vmem %s1570, %s1631
              // While loop
              $region76: #{aec_forward.1} parent=67 // loop_pre_header
                _
              $region77: #{aec_forward.1} parent=67 // loop_header
                %s1634 = sphi 0, %s1636
                %p1635 = scmp.ge.s32.totalorder %s1634, %s1627
                %s1639 = sphi 0, %s1646
                %s1640 = sphi %s1630, %s1649
                %s1641 = sphi %s1632, %s1650
              $region78: #{aec_forward.1} parent=67 // loop_header_branch
                %1638 = sbr.rel (%p1635) target = $region82
              $region79: #{aec_forward.1} parent=67 // loop_body
                %v1642 = vld [vmem:[%s1640] sm:%s1579]
                %1643 = vst [vmem:[%s1641] sm:%s1579] %v1642
                %s1644 = sadd.s32 1, %s1639
                %p1645 = scmp.ge.s32.totalorder %s1644, %s1627
                %s1646 = scalar_select %p1645, 0, %s1644
                %s1647 = smul.u32 %s1646, 4
                %s1648 = smul.u32 %s1646, 4
                %s1649 = scalar_lea.vmem %s1630, %s1647 [#allocation4]
                %s1650 = scalar_lea.vmem %s1632, %s1648
              $region80: #{aec_forward.1} parent=67 // loop_footer
                %s1636 = sadd.s32 %s1634, 1
              $region81: #{aec_forward.1} parent=67 // loop_footer_branch
                %1633 = sbr.rel target = $region77
              $region82: #{aec_forward.1} parent=67 // loop_exit
                _
            $region68: #{aec_forward.1} parent=59 // pred_fallthru
              _
          $region60: #{aec_forward.1} parent=55 // pred_fallthru
            _
          %1726 = vnop
        $region56: #{aec_forward.1} parent=47 // pred_fallthru
          _
      $region48: #{aec_forward.1} parent=5 // pred_fallthru
        _
      %p1727 = scmp.le.s32.totalorder 2, %s16
      // Predicated region
      $region101: #{aec_forward.1} parent=5 // pred_check
        %p1728 = pneg %p1727
      $region102: #{aec_forward.1} parent=5 // pred_check_branch
        %1730 = sbr.rel (%p1728) target = $region104
      $region103: #{aec_forward.1} parent=5 // pred_region
        %s1731 = ssub.s32 %s16, 2
        // Predicated region
        $region105: #{aec_forward.1} parent=103 // pred_check
          %p1732 = pneg %p197
        $region106: #{aec_forward.1} parent=103 // pred_check_branch
          %1734 = sbr.rel (%p1732) target = $region108
        $region107: #{aec_forward.1} parent=103 // pred_region
          %s1735 = sand.u32 %s182, 1
          %s1736 = sand.u32 %s182, 1
          %s1737 = smul.addr %s1736, 56
          %s1738 = scalar_lea.vmem [#allocation4], %s1737
        $region108: #{aec_forward.1} parent=103 // pred_fallthru
          _
      $region104: #{aec_forward.1} parent=5 // pred_fallthru
        _
    $region6: #{aec_forward.1} parent=1 // loop_footer
      %s20 = sadd.s32 1, %s16
    $region7: #{aec_forward.1} parent=1 // loop_footer_branch
      %15 = sbr.rel target = $region3
    $region8: #{aec_forward.1} parent=1 // loop_exit
      _
    %1739 = vsyncpa [#allocation3], 1
    %s1740 = scalar_lea.sflag [#allocation3], 1
    %1741 = vsyncpa %s1740, 1

</llo_original>
